<compile_context>
chip_gen: v7x
topology: tpu7x:2x2x1
jax: 0.10.0
libtpu: 0.0.40
codegen_flags: <defaults>
</compile_context>

<pallas_src>
import jax
import jax.numpy as jnp
from jax.experimental import pallas as pl
from jax.experimental.pallas import tpu as pltpu


def _linear_sub_kernel(x_ref, w_ref, b_ref, w2_ref, o_ref):
    # x_ref : (tb, K)   x1 tile, batch-major exactly as in HBM
    # w_ref : (N, K)    weight, PyTorch layout, grid-resident (block idx (0,0))
    # b_ref : (N, 1)    bias column, grid-resident
    # w2_ref: (tb, N)   subtrahend tile, batch-major
    # o_ref : (tb, N)   output tile, batch-major (dense writeback DMA)
    xt = jnp.transpose(x_ref[...])            # (K, tb): batch on the lane axis (XLU)
    w = w_ref[...]                            # (N, K)

    # Lane-dense accumulator (N, tb); K == 8 unrolled VPU broadcast-FMAs.
    acc = b_ref[...] + w[:, 0:1] * xt[0:1, :]            # (N,1)+(N,1)*(1,tb) -> (N,tb)
    for k in range(1, xt.shape[0]):
        acc = acc + w[:, k:k + 1] * xt[k:k + 1, :]

    # One in-kernel transpose back to batch-major, then the -w2 epilogue.
    out = jnp.transpose(acc) - w2_ref[...]                # (tb, N)
    o_ref[...] = out.astype(o_ref.dtype)


def linear_sub(x1, weight, bias, w2, *, block_b=4096):
    """out = x1 @ weight.T + bias - w2, fused in one Pallas TPU kernel."""
    B, K = x1.shape
    N = weight.shape[0]
    out_dtype = x1.dtype

    # 128-aligned batch tile so every in-kernel tile/transpose shape is
    # (8,128)-friendly; ragged B is handled by Pallas edge-block masking.
    tb = max(128, (int(block_b) // 128) * 128)

    # Small-batch fast path: one fused XLA op beats kernel-launch overhead.
    if B < tb:
        return (x1 @ weight.T + bias - w2).astype(out_dtype)

    if w2.shape[0] != B:                      # rare: broadcast a (1, N) w2
        w2 = jnp.broadcast_to(w2, (B, N))

    b_col = bias.reshape(N, 1)                # tiny, B-independent
    n_blk = pl.cdiv(B, tb)

    itemsize = jnp.dtype(x1.dtype).itemsize
    cost = pl.CostEstimate(
        flops=int(2 * B * K * N),
        transcendentals=0,
        bytes_accessed=int((B * K + 2 * B * N + N * K + N) * itemsize),
    )

    out = pl.pallas_call(
        _linear_sub_kernel,
        out_shape=jax.ShapeDtypeStruct((B, N), out_dtype),
        grid=(n_blk,),
        in_specs=[
            pl.BlockSpec((tb, K), lambda i: (i, 0)),   # x1 tile (un-transposed)
            pl.BlockSpec((N, K), lambda i: (0, 0)),    # weight: resident, no re-DMA
            pl.BlockSpec((N, 1), lambda i: (0, 0)),    # bias: resident
            pl.BlockSpec((tb, N), lambda i: (i, 0)),   # w2 tile (un-transposed)
        ],
        out_specs=pl.BlockSpec((tb, N), lambda i: (i, 0)),
        compiler_params=pltpu.CompilerParams(
            dimension_semantics=("parallel",),         # megacore-shardable batch axis
            vmem_limit_bytes=48 * 1024 * 1024,
        ),
        cost_estimate=cost,
    )(x1, weight, b_col, w2)

    return out


if __name__ == "__main__":
    key = jax.random.PRNGKey(0)
    k_x, k_w2, k_w, k_b, k_x2, k_w22, k_x3, k_w23 = jax.random.split(key, 8)

    # Shapes implied by the PyTorch module: x1 (1, 8), w2 (1, 32), Linear(8, 32).
    B, IN, OUT = 1, 8, 32
    x1 = jax.random.normal(k_x, (B, IN), dtype=jnp.float32)
    w2 = jax.random.normal(k_w2, (B, OUT), dtype=jnp.float32)
    weight = jax.random.normal(k_w, (OUT, IN), dtype=jnp.float32) * 0.1
    bias = jax.random.normal(k_b, (OUT,), dtype=jnp.float32) * 0.1

    # 1) Module-literal shape (B=1): small-batch fast path.
    out = jax.block_until_ready(linear_sub(x1, weight, bias, w2))
    ref = x1 @ weight.T + bias - w2
    assert out.shape == (B, OUT)
    assert jnp.allclose(out, ref, atol=1e-5, rtol=1e-5)

    # 2) Multi-block Pallas path with a ragged tail (grid=3, B % tb != 0, no padding).
    B2 = 3000
    x1b = jax.random.normal(k_x2, (B2, IN), dtype=jnp.float32)
    w2b = jax.random.normal(k_w22, (B2, OUT), dtype=jnp.float32)
    out2 = jax.block_until_ready(linear_sub(x1b, weight, bias, w2b, block_b=1024))
    ref2 = x1b @ weight.T + bias - w2b
    assert out2.shape == (B2, OUT)
    assert jnp.allclose(out2, ref2, atol=1e-4, rtol=1e-4)

    # 3) Default-tile Pallas path (tb=4096, grid=2).
    B3 = 8192
    x1c = jax.random.normal(k_x3, (B3, IN), dtype=jnp.float32)
    w2c = jax.random.normal(k_w23, (B3, OUT), dtype=jnp.float32)
    out3 = jax.block_until_ready(linear_sub(x1c, weight, bias, w2c))
    ref3 = x1c @ weight.T + bias - w2c
    assert out3.shape == (B3, OUT)
    assert jnp.allclose(out3, ref3, atol=1e-4, rtol=1e-4)

    print("KERNEL_OK")
</pallas_src>

<mosaic_0001>
module attributes {stable_mosaic.version = 11 : i64} {
  func.func @_linear_sub_kernel(%arg0: i32, %arg1: memref<1024x8xf32, #tpu.memory_space<vmem>>, %arg2: memref<32x8xf32, #tpu.memory_space<vmem>>, %arg3: memref<32x1xf32, #tpu.memory_space<vmem>>, %arg4: memref<1024x32xf32, #tpu.memory_space<vmem>>, %arg5: memref<1024x32xf32, #tpu.memory_space<vmem>>) attributes {dimension_semantics = [#tpu.dimension_semantics<parallel>], iteration_bounds = array<i64: 3>, scalar_prefetch = 0 : i64, scratch_operands = 0 : i64, tpu.core_type = #tpu.core_type<tc>, window_params = [{transform_indices = @transform_0, window_bounds = array<i64: 1024, 8>}, {pipeline_mode = #tpu.pipeline_mode<synchronous>, transform_indices = @transform_1, window_bounds = array<i64: 32, 8>}, {pipeline_mode = #tpu.pipeline_mode<synchronous>, transform_indices = @transform_2, window_bounds = array<i64: 32, 1>}, {transform_indices = @transform_3, window_bounds = array<i64: 1024, 32>}, {transform_indices = @transform_4, window_bounds = array<i64: 1024, 32>}]} {
    %c0 = arith.constant 0 : index
    %c0_0 = arith.constant 0 : index
    %0 = vector.load %arg1[%c0, %c0_0] : memref<1024x8xf32, #tpu.memory_space<vmem>>, vector<1024x8xf32>
    %1 = tpu.transpose %0, [1, 0] : vector<1024x8xf32> -> vector<8x1024xf32>
    %c0_1 = arith.constant 0 : index
    %c0_2 = arith.constant 0 : index
    %2 = vector.load %arg2[%c0_1, %c0_2] : memref<32x8xf32, #tpu.memory_space<vmem>>, vector<32x8xf32>
    %c0_3 = arith.constant 0 : index
    %c0_4 = arith.constant 0 : index
    %3 = vector.load %arg3[%c0_3, %c0_4] : memref<32x1xf32, #tpu.memory_space<vmem>>, vector<32x1xf32>
    %4 = vector.extract_strided_slice %2 {offsets = [0, 0], sizes = [32, 1], strides = [1, 1]} : vector<32x8xf32> to vector<32x1xf32>
    %5 = vector.extract_strided_slice %1 {offsets = [0, 0], sizes = [1, 1024], strides = [1, 1]} : vector<8x1024xf32> to vector<1x1024xf32>
    %6 = vector.broadcast %4 : vector<32x1xf32> to vector<32x1024xf32>
    %7 = vector.broadcast %5 : vector<1x1024xf32> to vector<32x1024xf32>
    %8 = arith.mulf %6, %7 : vector<32x1024xf32>
    %9 = vector.broadcast %3 : vector<32x1xf32> to vector<32x1024xf32>
    %10 = arith.addf %9, %8 : vector<32x1024xf32>
    %11 = vector.extract_strided_slice %2 {offsets = [0, 1], sizes = [32, 1], strides = [1, 1]} : vector<32x8xf32> to vector<32x1xf32>
    %12 = vector.extract_strided_slice %1 {offsets = [1, 0], sizes = [1, 1024], strides = [1, 1]} : vector<8x1024xf32> to vector<1x1024xf32>
    %13 = vector.broadcast %11 : vector<32x1xf32> to vector<32x1024xf32>
    %14 = vector.broadcast %12 : vector<1x1024xf32> to vector<32x1024xf32>
    %15 = arith.mulf %13, %14 : vector<32x1024xf32>
    %16 = arith.addf %10, %15 : vector<32x1024xf32>
    %17 = vector.extract_strided_slice %2 {offsets = [0, 2], sizes = [32, 1], strides = [1, 1]} : vector<32x8xf32> to vector<32x1xf32>
    %18 = vector.extract_strided_slice %1 {offsets = [2, 0], sizes = [1, 1024], strides = [1, 1]} : vector<8x1024xf32> to vector<1x1024xf32>
    %19 = vector.broadcast %17 : vector<32x1xf32> to vector<32x1024xf32>
    %20 = vector.broadcast %18 : vector<1x1024xf32> to vector<32x1024xf32>
    %21 = arith.mulf %19, %20 : vector<32x1024xf32>
    %22 = arith.addf %16, %21 : vector<32x1024xf32>
    %23 = vector.extract_strided_slice %2 {offsets = [0, 3], sizes = [32, 1], strides = [1, 1]} : vector<32x8xf32> to vector<32x1xf32>
    %24 = vector.extract_strided_slice %1 {offsets = [3, 0], sizes = [1, 1024], strides = [1, 1]} : vector<8x1024xf32> to vector<1x1024xf32>
    %25 = vector.broadcast %23 : vector<32x1xf32> to vector<32x1024xf32>
    %26 = vector.broadcast %24 : vector<1x1024xf32> to vector<32x1024xf32>
    %27 = arith.mulf %25, %26 : vector<32x1024xf32>
    %28 = arith.addf %22, %27 : vector<32x1024xf32>
    %29 = vector.extract_strided_slice %2 {offsets = [0, 4], sizes = [32, 1], strides = [1, 1]} : vector<32x8xf32> to vector<32x1xf32>
    %30 = vector.extract_strided_slice %1 {offsets = [4, 0], sizes = [1, 1024], strides = [1, 1]} : vector<8x1024xf32> to vector<1x1024xf32>
    %31 = vector.broadcast %29 : vector<32x1xf32> to vector<32x1024xf32>
    %32 = vector.broadcast %30 : vector<1x1024xf32> to vector<32x1024xf32>
    %33 = arith.mulf %31, %32 : vector<32x1024xf32>
    %34 = arith.addf %28, %33 : vector<32x1024xf32>
    %35 = vector.extract_strided_slice %2 {offsets = [0, 5], sizes = [32, 1], strides = [1, 1]} : vector<32x8xf32> to vector<32x1xf32>
    %36 = vector.extract_strided_slice %1 {offsets = [5, 0], sizes = [1, 1024], strides = [1, 1]} : vector<8x1024xf32> to vector<1x1024xf32>
    %37 = vector.broadcast %35 : vector<32x1xf32> to vector<32x1024xf32>
    %38 = vector.broadcast %36 : vector<1x1024xf32> to vector<32x1024xf32>
    %39 = arith.mulf %37, %38 : vector<32x1024xf32>
    %40 = arith.addf %34, %39 : vector<32x1024xf32>
    %41 = vector.extract_strided_slice %2 {offsets = [0, 6], sizes = [32, 1], strides = [1, 1]} : vector<32x8xf32> to vector<32x1xf32>
    %42 = vector.extract_strided_slice %1 {offsets = [6, 0], sizes = [1, 1024], strides = [1, 1]} : vector<8x1024xf32> to vector<1x1024xf32>
    %43 = vector.broadcast %41 : vector<32x1xf32> to vector<32x1024xf32>
    %44 = vector.broadcast %42 : vector<1x1024xf32> to vector<32x1024xf32>
    %45 = arith.mulf %43, %44 : vector<32x1024xf32>
    %46 = arith.addf %40, %45 : vector<32x1024xf32>
    %47 = vector.extract_strided_slice %2 {offsets = [0, 7], sizes = [32, 1], strides = [1, 1]} : vector<32x8xf32> to vector<32x1xf32>
    %48 = vector.extract_strided_slice %1 {offsets = [7, 0], sizes = [1, 1024], strides = [1, 1]} : vector<8x1024xf32> to vector<1x1024xf32>
    %49 = vector.broadcast %47 : vector<32x1xf32> to vector<32x1024xf32>
    %50 = vector.broadcast %48 : vector<1x1024xf32> to vector<32x1024xf32>
    %51 = arith.mulf %49, %50 : vector<32x1024xf32>
    %52 = arith.addf %46, %51 : vector<32x1024xf32>
    %53 = tpu.transpose %52, [1, 0] : vector<32x1024xf32> -> vector<1024x32xf32>
    %c0_5 = arith.constant 0 : index
    %c0_6 = arith.constant 0 : index
    %54 = vector.load %arg4[%c0_5, %c0_6] : memref<1024x32xf32, #tpu.memory_space<vmem>>, vector<1024x32xf32>
    %55 = arith.subf %53, %54 : vector<1024x32xf32>
    %c0_7 = arith.constant 0 : index
    %c0_8 = arith.constant 0 : index
    %56 = vector.load %arg5[%c0_7, %c0_8] : memref<1024x32xf32, #tpu.memory_space<vmem>>, vector<1024x32xf32>
    tpu.vector_store %arg5[%c0_7, %c0_8], %55 {strides = array<i32>} : memref<1024x32xf32, #tpu.memory_space<vmem>>, vector<1024x32xf32>,
    return
  }
  func.func @transform_0(%arg0: i32) -> (i32, i32) {
    %c0_i32 = arith.constant 0 : i32
    %c0_i32_0 = arith.constant 0 : i32
    return %arg0, %c0_i32 : i32, i32
  }
  func.func @transform_1(%arg0: i32) -> (i32, i32) {
    %c0_i32 = arith.constant 0 : i32
    %c0_i32_0 = arith.constant 0 : i32
    %c0_i32_1 = arith.constant 0 : i32
    return %c0_i32, %c0_i32_0 : i32, i32
  }
  func.func @transform_2(%arg0: i32) -> (i32, i32) {
    %c0_i32 = arith.constant 0 : i32
    %c0_i32_0 = arith.constant 0 : i32
    %c0_i32_1 = arith.constant 0 : i32
    return %c0_i32, %c0_i32_0 : i32, i32
  }
  func.func @transform_3(%arg0: i32) -> (i32, i32) {
    %c0_i32 = arith.constant 0 : i32
    %c0_i32_0 = arith.constant 0 : i32
    return %arg0, %c0_i32 : i32, i32
  }
  func.func @transform_4(%arg0: i32) -> (i32, i32) {
    %c0_i32 = arith.constant 0 : i32
    %c0_i32_0 = arith.constant 0 : i32
    return %arg0, %c0_i32 : i32, i32
  }
}

</mosaic_0001>

<llo_original>
// kernel: tpu_custom_call.1
$region0: #{tpu_custom_call.1}
  #allocation0 [shape = 'u32[]', space=smem, size = 0x4, offset = 0x4, fixed_abs, tag = 'smem constant byte address 0x4 - core index']
  #allocation1 [shape = 'u32[144,128]{1,0:T(1,128)}', space=vmem, size = 0x12000, scoped, tag = 'internal scratch']
  %s0 = inlined_call_operand.vmem [shape: f32[3000,8], index: 0, kind: input, shape index: {}]
  %s1 = inlined_call_operand.vmem [shape: f32[32,8], index: 1, kind: input, shape index: {}]
  %s2 = inlined_call_operand.vmem [shape: f32[32,1], index: 2, kind: input, shape index: {}]
  %s3 = inlined_call_operand.vmem [shape: f32[3000,32], index: 3, kind: input, shape index: {}]
  %s4 = inlined_call_operand.vmem [shape: f32[3000,32], index: 4, kind: output, shape index: {}]
  %s5 = sld [smem:[#allocation0]]
  $region97: #{tpu_custom_call.1} parent=0
    _
  %s7 = ssub.s32 1, %s5
  %s8 = scalar_select 0, %s7, %s5
  $region1: #{tpu_custom_call.1} parent=0
    #allocation2 [shape = 'u8[1048576]{0}', space=vmem, size = 0x100000, scoped, tag = 'output window, operand 0']
    loop: start=0, step=1, limit=5
    $region2: #{tpu_custom_call.1} parent=1 // loop_pre_header
      _
    $region3: #{tpu_custom_call.1} parent=1 // loop_header
      %s10 = sphi 0, %s14
      %p11 = scmp.ge.s32.totalorder %s10, 5
      %s20 = sphi 0, %s22
      %s23 = sphi 0, %s20
      %s24 = sphi 0, %s23
      %s40 = sphi 0, %s24
      %s44 = sphi 0, %s44
      %s46 = sphi 0, %s44
      %s47 = sphi 0, %s46
      %s61 = sphi 0, %s47
      %s65 = sphi 0, %s65
      %s67 = sphi 0, %s65
      %s68 = sphi 0, %s67
      %s82 = sphi 0, %s68
      %s88 = sphi 0, %s90
      %s91 = sphi 0, %s88
      %s92 = sphi 0, %s91
      %s108 = sphi 0, %s92
      %s114 = sphi 0, %s116
      %s117 = sphi 0, %s114
      %s118 = sphi 0, %s117
      %s134 = sphi 0, %s118
    $region4: #{tpu_custom_call.1} parent=1 // loop_header_branch
      %13 = sbr.rel (%p11) target = $region8
    $region5: #{tpu_custom_call.1} parent=1 // loop_body
      %s15 = ssub.s32 %s10, 1
      %s16 = ssub.s32 %s10, 2
      %s17 = sadd.s32 %s10, 1
      %s18 = ssub.s32 %s10, %s17
      %p19 = scmp.eq.s32.totalorder %s18, 0
      %s21 = sadd.s32 %s20, 1
      %s22 = scalar_select %p19, %s20, %s21
      %p25 = pneg %p19
      %p26 = scmp.eq.s32.totalorder %s10, 2
      %p27 = por %p25, %p26
      %p28 = scmp.ne.s32.totalorder %s20, %s23
      %p29 = scmp.eq.s32.totalorder %s10, 0
      %p30 = por %p28, %p29
      %p31 = scmp.ne.s32.totalorder %s20, %s23
      %p32 = scmp.eq.s32.totalorder %s15, 2
      %p33 = por %p31, %p32
      %p34 = scmp.ne.s32.totalorder %s23, %s24
      %p35 = scmp.eq.s32.totalorder %s15, 0
      %p36 = por %p34, %p35
      %p37 = scmp.ne.s32.totalorder %s23, %s24
      %p38 = scmp.eq.s32.totalorder %s16, 2
      %p39 = por %p37, %p38
      %p41 = scmp.ne.s32.totalorder %s24, %s40
      %p42 = scmp.eq.s32.totalorder %s16, 0
      %p43 = por %p41, %p42
      %s45 = sadd.s32 %s44, 1
      %p48 = scmp.eq.s32.totalorder %s10, 2
      %p49 = scmp.ne.s32.totalorder %s44, %s46
      %p50 = scmp.eq.s32.totalorder %s10, 0
      %p51 = por %p49, %p50
      %p52 = scmp.ne.s32.totalorder %s44, %s46
      %p53 = scmp.eq.s32.totalorder %s15, 2
      %p54 = por %p52, %p53
      %p55 = scmp.ne.s32.totalorder %s46, %s47
      %p56 = scmp.eq.s32.totalorder %s15, 0
      %p57 = por %p55, %p56
      %p58 = scmp.ne.s32.totalorder %s46, %s47
      %p59 = scmp.eq.s32.totalorder %s16, 2
      %p60 = por %p58, %p59
      %p62 = scmp.ne.s32.totalorder %s47, %s61
      %p63 = scmp.eq.s32.totalorder %s16, 0
      %p64 = por %p62, %p63
      %s66 = sadd.s32 %s65, 1
      %p69 = scmp.eq.s32.totalorder %s10, 2
      %p70 = scmp.ne.s32.totalorder %s65, %s67
      %p71 = scmp.eq.s32.totalorder %s10, 0
      %p72 = por %p70, %p71
      %p73 = scmp.ne.s32.totalorder %s65, %s67
      %p74 = scmp.eq.s32.totalorder %s15, 2
      %p75 = por %p73, %p74
      %p76 = scmp.ne.s32.totalorder %s67, %s68
      %p77 = scmp.eq.s32.totalorder %s15, 0
      %p78 = por %p76, %p77
      %p79 = scmp.ne.s32.totalorder %s67, %s68
      %p80 = scmp.eq.s32.totalorder %s16, 2
      %p81 = por %p79, %p80
      %p83 = scmp.ne.s32.totalorder %s68, %s82
      %p84 = scmp.eq.s32.totalorder %s16, 0
      %p85 = por %p83, %p84
      %s86 = ssub.s32 %s10, %s17
      %p87 = scmp.eq.s32.totalorder %s86, 0
      %s89 = sadd.s32 %s88, 1
      %s90 = scalar_select %p87, %s88, %s89
      %p93 = pneg %p87
      %p94 = scmp.eq.s32.totalorder %s10, 2
      %p95 = por %p93, %p94
      %p96 = scmp.ne.s32.totalorder %s88, %s91
      %p97 = scmp.eq.s32.totalorder %s10, 0
      %p98 = por %p96, %p97
      %p99 = scmp.ne.s32.totalorder %s88, %s91
      %p100 = scmp.eq.s32.totalorder %s15, 2
      %p101 = por %p99, %p100
      %p102 = scmp.ne.s32.totalorder %s91, %s92
      %p103 = scmp.eq.s32.totalorder %s15, 0
      %p104 = por %p102, %p103
      %p105 = scmp.ne.s32.totalorder %s91, %s92
      %p106 = scmp.eq.s32.totalorder %s16, 2
      %p107 = por %p105, %p106
      %p109 = scmp.ne.s32.totalorder %s92, %s108
      %p110 = scmp.eq.s32.totalorder %s16, 0
      %p111 = por %p109, %p110
      %s112 = ssub.s32 %s10, %s17
      %p113 = scmp.eq.s32.totalorder %s112, 0
      %s115 = sadd.s32 %s114, 1
      %s116 = scalar_select %p113, %s114, %s115
      %p119 = pneg %p113
      %p120 = scmp.eq.s32.totalorder %s10, 2
      %p121 = por %p119, %p120
      %p122 = scmp.ne.s32.totalorder %s114, %s117
      %p123 = scmp.eq.s32.totalorder %s10, 0
      %p124 = por %p122, %p123
      %p125 = scmp.ne.s32.totalorder %s114, %s117
      %p126 = scmp.eq.s32.totalorder %s15, 2
      %p127 = por %p125, %p126
      %p128 = scmp.ne.s32.totalorder %s117, %s118
      %p129 = scmp.eq.s32.totalorder %s15, 0
      %p130 = por %p128, %p129
      %p131 = scmp.ne.s32.totalorder %s117, %s118
      %p132 = scmp.eq.s32.totalorder %s16, 2
      %p133 = por %p131, %p132
      %p135 = scmp.ne.s32.totalorder %s118, %s134
      %p136 = scmp.eq.s32.totalorder %s16, 0
      %p137 = por %p135, %p136
      %p138 = scmp.le.s32.totalorder 1, %s10
      %p139 = scmp.lt.s32.totalorder %s10, 4
      %p140 = pnand %p138, %p139
      %p141 = pneg %p140
      // Predicated region
      $region9: #{tpu_custom_call.1} parent=5 // pred_check
        _
      $region10: #{tpu_custom_call.1} parent=5 // pred_check_branch
        %143 = sbr.rel (%p140) target = $region12
      $region11: #{tpu_custom_call.1} parent=5 // pred_region
        %s144 = ssub.s32 %s10, 1
        // Predicated region
        $region13: #{tpu_custom_call.1} parent=11 // pred_check
          %p145 = pneg %p57
        $region14: #{tpu_custom_call.1} parent=11 // pred_check_branch
          %147 = sbr.rel (%p145) target = $region16
        $region15: #{tpu_custom_call.1} parent=11 // pred_region
          _
        $region16: #{tpu_custom_call.1} parent=11 // pred_fallthru
          _
        // Predicated region
        $region17: #{tpu_custom_call.1} parent=11 // pred_check
          %p148 = pneg %p78
        $region18: #{tpu_custom_call.1} parent=11 // pred_check_branch
          %150 = sbr.rel (%p148) target = $region20
        $region19: #{tpu_custom_call.1} parent=11 // pred_region
          _
        $region20: #{tpu_custom_call.1} parent=11 // pred_fallthru
          _
      $region12: #{tpu_custom_call.1} parent=5 // pred_fallthru
        _
      %p151 = scmp.lt.s32.totalorder %s10, 3
      // Predicated region
      $region21: #{tpu_custom_call.1} parent=5 // pred_check
        %p152 = pneg %p151
      $region22: #{tpu_custom_call.1} parent=5 // pred_check_branch
        %154 = sbr.rel (%p152) target = $region24
      $region23: #{tpu_custom_call.1} parent=5 // pred_region
        // Predicated region
        $region25: #{tpu_custom_call.1} parent=23 // pred_check
          %p155 = pneg %p30
        $region26: #{tpu_custom_call.1} parent=23 // pred_check_branch
          %157 = sbr.rel (%p155) target = $region28
        $region27: #{tpu_custom_call.1} parent=23 // pred_region
          %s158 = smul.u32 128, %s10
          %s159 = ssub.s32 375, %s158
          %p160 = scmp.lt.s32.totalorder %s159, 128
          %s161 = scalar_select %p160, %s159, 128
          %s162 = smul.u32 128, %s161
          %p163 = scmp.lt.s32.totalorder %s158, 374
          %s164 = scalar_select %p163, %s158, 374
          %s165 = smul.addr %s164, 8
          %s166 = scalar_lea.vmem %s0, %s165
          %s167 = smul.u32 128, %s10
          %s168 = ssub.s32 375, %s167
          %p169 = scmp.lt.s32.totalorder %s168, 128
          %s170 = scalar_select %p169, %s168, 128
          %s171 = smul.u32 128, %s170
        $region28: #{tpu_custom_call.1} parent=23 // pred_fallthru
          _
        // Predicated region
        $region29: #{tpu_custom_call.1} parent=23 // pred_check
          %p172 = pneg %p98
        $region30: #{tpu_custom_call.1} parent=23 // pred_check_branch
          %174 = sbr.rel (%p172) target = $region32
        $region31: #{tpu_custom_call.1} parent=23 // pred_region
          %s175 = smul.u32 128, %s10
          %s176 = ssub.s32 375, %s175
          %p177 = scmp.lt.s32.totalorder %s176, 128
          %s178 = scalar_select %p177, %s176, 128
          %s179 = smul.u32 128, %s178
          %p180 = scmp.lt.s32.totalorder %s175, 374
          %s181 = scalar_select %p180, %s175, 374
          %s182 = smul.addr %s181, 8
          %s183 = scalar_lea.vmem %s3, %s182
          %s184 = smul.u32 128, %s10
          %s185 = ssub.s32 375, %s184
          %p186 = scmp.lt.s32.totalorder %s185, 128
          %s187 = scalar_select %p186, %s185, 128
          %s188 = smul.u32 128, %s187
        $region32: #{tpu_custom_call.1} parent=23 // pred_fallthru
          _
      $region24: #{tpu_custom_call.1} parent=5 // pred_fallthru
        _
      %p189 = scmp.le.s32.totalorder 1, %s10
      %p190 = scmp.lt.s32.totalorder %s10, 4
      %p191 = pnand %p189, %p190
      %p192 = pneg %p191
      // Predicated region
      $region33: #{tpu_custom_call.1} parent=5 // pred_check
        _
      $region34: #{tpu_custom_call.1} parent=5 // pred_check_branch
        %194 = sbr.rel (%p191) target = $region36
      $region35: #{tpu_custom_call.1} parent=5 // pred_region
        %s195 = ssub.s32 %s10, 1
        %s196 = smul.u32 128, %s15
        %s197 = ssub.s32 375, %s196
        %p198 = scmp.lt.s32.totalorder %s197, 128
        %s199 = scalar_select %p198, %s197, 128
        %s200 = smul.u32 128, %s199
        %p201 = scmp.lt.s32.totalorder %s196, 374
        %s202 = scalar_select %p201, %s196, 374
        %s203 = smul.addr %s202, 8
        %s204 = scalar_lea.vmem %s0, %s203
        %p205 = pneg %p36
        %p206 = pneg %p33
        %p207 = pneg %p57
        %p208 = pneg %p54
        %p209 = pneg %p78
        %p210 = pneg %p75
        %s211 = smul.u32 128, %s15
        %s212 = ssub.s32 375, %s211
        %p213 = scmp.lt.s32.totalorder %s212, 128
        %s214 = scalar_select %p213, %s212, 128
        %s215 = smul.u32 128, %s214
        %p216 = scmp.lt.s32.totalorder %s211, 374
        %s217 = scalar_select %p216, %s211, 374
        %s218 = smul.addr %s217, 8
        %s219 = scalar_lea.vmem %s3, %s218
        %p220 = pneg %p104
        %p221 = pneg %p101
        %p222 = pneg %p130
        %p223 = pneg %p127
        %s224 = sand.u32 %s117, 1
        %s225 = sand.u32 %s117, 1
        %s226 = smul.addr %s225, 1024
        %s227 = scalar_lea.vmem [#allocation2], %s226
        %s228 = smul.u32 128, %s15
        %s229 = ssub.s32 375, %s228
        %p230 = scmp.lt.s32.totalorder %s229, 128
        %s231 = scalar_select %p230, %s229, 128
        %s232 = smul.u32 128, %s231
        %p233 = scmp.lt.s32.totalorder %s228, 374
        %s234 = scalar_select %p233, %s228, 374
        %s235 = smul.addr %s234, 8
        %s236 = scalar_lea.vmem %s0, %s235
        %s237 = smul.u32 128, %s15
        %s238 = ssub.s32 375, %s237
        %p239 = scmp.lt.s32.totalorder %s238, 128
        %s240 = scalar_select %p239, %s238, 128
        %s241 = smul.u32 128, %s240
        %s242 = smul.u32 128, %s15
        %s243 = ssub.s32 375, %s242
        %p244 = scmp.lt.s32.totalorder %s243, 128
        %s245 = scalar_select %p244, %s243, 128
        %s246 = smul.u32 128, %s245
        %p247 = scmp.lt.s32.totalorder %s242, 374
        %s248 = scalar_select %p247, %s242, 374
        %s249 = smul.addr %s248, 8
        %s250 = scalar_lea.vmem %s3, %s249
        %s251 = smul.u32 128, %s15
        %s252 = ssub.s32 375, %s251
        %p253 = scmp.lt.s32.totalorder %s252, 128
        %s254 = scalar_select %p253, %s252, 128
        %s255 = smul.u32 128, %s254
        %s256 = smul.u32 128, %s15
        %s257 = ssub.s32 375, %s256
        %p258 = scmp.lt.s32.totalorder %s257, 128
        %s259 = scalar_select %p258, %s257, 128
        %s260 = smul.u32 128, %s259
        %v261 = vld [vmem:[%s236] sm:$0xff]
        %v262 = vld [vmem:[%s236 + $0x8] sm:$0xff]
        %v263 = vld [vmem:[%s236 + $0x10] sm:$0xff]
        %v264 = vld [vmem:[%s236 + $0x18] sm:$0xff]
        %v265 = vld [vmem:[%s236 + $0x20] sm:$0xff]
        %v266 = vld [vmem:[%s236 + $0x28] sm:$0xff]
        %v267 = vld [vmem:[%s236 + $0x30] sm:$0xff]
        %v268 = vld [vmem:[%s236 + $0x38] sm:$0xff]
        %v269 = vld [vmem:[%s236 + $0x40] sm:$0xff]
        %v270 = vld [vmem:[%s236 + $0x48] sm:$0xff]
        %v271 = vld [vmem:[%s236 + $0x50] sm:$0xff]
        %v272 = vld [vmem:[%s236 + $0x58] sm:$0xff]
        %v273 = vld [vmem:[%s236 + $0x60] sm:$0xff]
        %v274 = vld [vmem:[%s236 + $0x68] sm:$0xff]
        %v275 = vld [vmem:[%s236 + $0x70] sm:$0xff]
        %v276 = vld [vmem:[%s236 + $0x78] sm:$0xff]
        %v277 = vld [vmem:[%s236 + $0x80] sm:$0xff]
        %v278 = vld [vmem:[%s236 + $0x88] sm:$0xff]
        %v279 = vld [vmem:[%s236 + $0x90] sm:$0xff]
        %v280 = vld [vmem:[%s236 + $0x98] sm:$0xff]
        %v281 = vld [vmem:[%s236 + $0xa0] sm:$0xff]
        %v282 = vld [vmem:[%s236 + $0xa8] sm:$0xff]
        %v283 = vld [vmem:[%s236 + $0xb0] sm:$0xff]
        %v284 = vld [vmem:[%s236 + $0xb8] sm:$0xff]
        %v285 = vld [vmem:[%s236 + $0xc0] sm:$0xff]
        %v286 = vld [vmem:[%s236 + $0xc8] sm:$0xff]
        %v287 = vld [vmem:[%s236 + $0xd0] sm:$0xff]
        %v288 = vld [vmem:[%s236 + $0xd8] sm:$0xff]
        %v289 = vld [vmem:[%s236 + $0xe0] sm:$0xff]
        %v290 = vld [vmem:[%s236 + $0xe8] sm:$0xff]
        %v291 = vld [vmem:[%s236 + $0xf0] sm:$0xff]
        %v292 = vld [vmem:[%s236 + $0xf8] sm:$0xff]
        %v293 = vld [vmem:[%s236 + $0x100] sm:$0xff]
        %v294 = vld [vmem:[%s236 + $0x108] sm:$0xff]
        %v295 = vld [vmem:[%s236 + $0x110] sm:$0xff]
        %v296 = vld [vmem:[%s236 + $0x118] sm:$0xff]
        %v297 = vld [vmem:[%s236 + $0x120] sm:$0xff]
        %v298 = vld [vmem:[%s236 + $0x128] sm:$0xff]
        %v299 = vld [vmem:[%s236 + $0x130] sm:$0xff]
        %v300 = vld [vmem:[%s236 + $0x138] sm:$0xff]
        %v301 = vld [vmem:[%s236 + $0x140] sm:$0xff]
        %v302 = vld [vmem:[%s236 + $0x148] sm:$0xff]
        %v303 = vld [vmem:[%s236 + $0x150] sm:$0xff]
        %v304 = vld [vmem:[%s236 + $0x158] sm:$0xff]
        %v305 = vld [vmem:[%s236 + $0x160] sm:$0xff]
        %v306 = vld [vmem:[%s236 + $0x168] sm:$0xff]
        %v307 = vld [vmem:[%s236 + $0x170] sm:$0xff]
        %v308 = vld [vmem:[%s236 + $0x178] sm:$0xff]
        %v309 = vld [vmem:[%s236 + $0x180] sm:$0xff]
        %v310 = vld [vmem:[%s236 + $0x188] sm:$0xff]
        %v311 = vld [vmem:[%s236 + $0x190] sm:$0xff]
        %v312 = vld [vmem:[%s236 + $0x198] sm:$0xff]
        %v313 = vld [vmem:[%s236 + $0x1a0] sm:$0xff]
        %v314 = vld [vmem:[%s236 + $0x1a8] sm:$0xff]
        %v315 = vld [vmem:[%s236 + $0x1b0] sm:$0xff]
        %v316 = vld [vmem:[%s236 + $0x1b8] sm:$0xff]
        %v317 = vld [vmem:[%s236 + $0x1c0] sm:$0xff]
        %v318 = vld [vmem:[%s236 + $0x1c8] sm:$0xff]
        %v319 = vld [vmem:[%s236 + $0x1d0] sm:$0xff]
        %v320 = vld [vmem:[%s236 + $0x1d8] sm:$0xff]
        %v321 = vld [vmem:[%s236 + $0x1e0] sm:$0xff]
        %v322 = vld [vmem:[%s236 + $0x1e8] sm:$0xff]
        %v323 = vld [vmem:[%s236 + $0x1f0] sm:$0xff]
        %v324 = vld [vmem:[%s236 + $0x1f8] sm:$0xff]
        %v325 = vld [vmem:[%s236 + $0x200] sm:$0xff]
        %v326 = vld [vmem:[%s236 + $0x208] sm:$0xff]
        %v327 = vld [vmem:[%s236 + $0x210] sm:$0xff]
        %v328 = vld [vmem:[%s236 + $0x218] sm:$0xff]
        %v329 = vld [vmem:[%s236 + $0x220] sm:$0xff]
        %v330 = vld [vmem:[%s236 + $0x228] sm:$0xff]
        %v331 = vld [vmem:[%s236 + $0x230] sm:$0xff]
        %v332 = vld [vmem:[%s236 + $0x238] sm:$0xff]
        %v333 = vld [vmem:[%s236 + $0x240] sm:$0xff]
        %v334 = vld [vmem:[%s236 + $0x248] sm:$0xff]
        %v335 = vld [vmem:[%s236 + $0x250] sm:$0xff]
        %v336 = vld [vmem:[%s236 + $0x258] sm:$0xff]
        %v337 = vld [vmem:[%s236 + $0x260] sm:$0xff]
        %v338 = vld [vmem:[%s236 + $0x268] sm:$0xff]
        %v339 = vld [vmem:[%s236 + $0x270] sm:$0xff]
        %v340 = vld [vmem:[%s236 + $0x278] sm:$0xff]
        %v341 = vld [vmem:[%s236 + $0x280] sm:$0xff]
        %v342 = vld [vmem:[%s236 + $0x288] sm:$0xff]
        %v343 = vld [vmem:[%s236 + $0x290] sm:$0xff]
        %v344 = vld [vmem:[%s236 + $0x298] sm:$0xff]
        %v345 = vld [vmem:[%s236 + $0x2a0] sm:$0xff]
        %v346 = vld [vmem:[%s236 + $0x2a8] sm:$0xff]
        %v347 = vld [vmem:[%s236 + $0x2b0] sm:$0xff]
        %v348 = vld [vmem:[%s236 + $0x2b8] sm:$0xff]
        %v349 = vld [vmem:[%s236 + $0x2c0] sm:$0xff]
        %v350 = vld [vmem:[%s236 + $0x2c8] sm:$0xff]
        %v351 = vld [vmem:[%s236 + $0x2d0] sm:$0xff]
        %v352 = vld [vmem:[%s236 + $0x2d8] sm:$0xff]
        %v353 = vld [vmem:[%s236 + $0x2e0] sm:$0xff]
        %v354 = vld [vmem:[%s236 + $0x2e8] sm:$0xff]
        %v355 = vld [vmem:[%s236 + $0x2f0] sm:$0xff]
        %v356 = vld [vmem:[%s236 + $0x2f8] sm:$0xff]
        %v357 = vld [vmem:[%s236 + $0x300] sm:$0xff]
        %v358 = vld [vmem:[%s236 + $0x308] sm:$0xff]
        %v359 = vld [vmem:[%s236 + $0x310] sm:$0xff]
        %v360 = vld [vmem:[%s236 + $0x318] sm:$0xff]
        %v361 = vld [vmem:[%s236 + $0x320] sm:$0xff]
        %v362 = vld [vmem:[%s236 + $0x328] sm:$0xff]
        %v363 = vld [vmem:[%s236 + $0x330] sm:$0xff]
        %v364 = vld [vmem:[%s236 + $0x338] sm:$0xff]
        %v365 = vld [vmem:[%s236 + $0x340] sm:$0xff]
        %v366 = vld [vmem:[%s236 + $0x348] sm:$0xff]
        %v367 = vld [vmem:[%s236 + $0x350] sm:$0xff]
        %v368 = vld [vmem:[%s236 + $0x358] sm:$0xff]
        %v369 = vld [vmem:[%s236 + $0x360] sm:$0xff]
        %v370 = vld [vmem:[%s236 + $0x368] sm:$0xff]
        %v371 = vld [vmem:[%s236 + $0x370] sm:$0xff]
        %v372 = vld [vmem:[%s236 + $0x378] sm:$0xff]
        %v373 = vld [vmem:[%s236 + $0x380] sm:$0xff]
        %v374 = vld [vmem:[%s236 + $0x388] sm:$0xff]
        %v375 = vld [vmem:[%s236 + $0x390] sm:$0xff]
        %v376 = vld [vmem:[%s236 + $0x398] sm:$0xff]
        %v377 = vld [vmem:[%s236 + $0x3a0] sm:$0xff]
        %v378 = vld [vmem:[%s236 + $0x3a8] sm:$0xff]
        %v379 = vld [vmem:[%s236 + $0x3b0] sm:$0xff]
        %v380 = vld [vmem:[%s236 + $0x3b8] sm:$0xff]
        %v381 = vld [vmem:[%s236 + $0x3c0] sm:$0xff]
        %v382 = vld [vmem:[%s236 + $0x3c8] sm:$0xff]
        %v383 = vld [vmem:[%s236 + $0x3d0] sm:$0xff]
        %v384 = vld [vmem:[%s236 + $0x3d8] sm:$0xff]
        %v385 = vld [vmem:[%s236 + $0x3e0] sm:$0xff]
        %v386 = vld [vmem:[%s236 + $0x3e8] sm:$0xff]
        %v387 = vld [vmem:[%s236 + $0x3f0] sm:$0xff]
        %v388 = vld [vmem:[%s236 + $0x3f8] sm:$0xff]
        %389 = vxpose.xlu0.b32.start [1/16] %v261, 128
        %390 = vxpose.xlu0.b32.cont [2/16] %v262, 128
        %391 = vxpose.xlu0.b32.cont [3/16] %v263, 128
        %392 = vxpose.xlu0.b32.cont [4/16] %v264, 128
        %393 = vxpose.xlu0.b32.cont [5/16] %v265, 128
        %394 = vxpose.xlu0.b32.cont [6/16] %v266, 128
        %395 = vxpose.xlu0.b32.cont [7/16] %v267, 128
        %396 = vxpose.xlu0.b32.cont [8/16] %v268, 128
        %397 = vxpose.xlu0.b32.cont [9/16] %v269, 128
        %398 = vxpose.xlu0.b32.cont [10/16] %v270, 128
        %399 = vxpose.xlu0.b32.cont [11/16] %v271, 128
        %400 = vxpose.xlu0.b32.cont [12/16] %v272, 128
        %401 = vxpose.xlu0.b32.cont [13/16] %v273, 128
        %402 = vxpose.xlu0.b32.cont [14/16] %v274, 128
        %403 = vxpose.xlu0.b32.cont [15/16] %v275, 128
        %404 = vxpose.xlu0.b32.end [16/16] %v276, 128
        %v405 = vpop.trf.xlu0
        %v406 = vpop.trf.xlu0
        %v407 = vpop.trf.xlu0
        %v408 = vpop.trf.xlu0
        %v409 = vpop.trf.xlu0
        %v410 = vpop.trf.xlu0
        %v411 = vpop.trf.xlu0
        %v412 = vpop.trf.xlu0
        %v413 = vpop.trf.xlu0
        %v414 = vpop.trf.xlu0
        %v415 = vpop.trf.xlu0
        %v416 = vpop.trf.xlu0
        %v417 = vpop.trf.xlu0
        %v418 = vpop.trf.xlu0
        %v419 = vpop.trf.xlu0
        %v420 = vpop.trf.xlu0
        %421 = vxpose.xlu0.b32.start [1/16] %v277, 128
        %422 = vxpose.xlu0.b32.cont [2/16] %v278, 128
        %423 = vxpose.xlu0.b32.cont [3/16] %v279, 128
        %424 = vxpose.xlu0.b32.cont [4/16] %v280, 128
        %425 = vxpose.xlu0.b32.cont [5/16] %v281, 128
        %426 = vxpose.xlu0.b32.cont [6/16] %v282, 128
        %427 = vxpose.xlu0.b32.cont [7/16] %v283, 128
        %428 = vxpose.xlu0.b32.cont [8/16] %v284, 128
        %429 = vxpose.xlu0.b32.cont [9/16] %v285, 128
        %430 = vxpose.xlu0.b32.cont [10/16] %v286, 128
        %431 = vxpose.xlu0.b32.cont [11/16] %v287, 128
        %432 = vxpose.xlu0.b32.cont [12/16] %v288, 128
        %433 = vxpose.xlu0.b32.cont [13/16] %v289, 128
        %434 = vxpose.xlu0.b32.cont [14/16] %v290, 128
        %435 = vxpose.xlu0.b32.cont [15/16] %v291, 128
        %436 = vxpose.xlu0.b32.end [16/16] %v292, 128
        %v437 = vpop.trf.xlu0
        %v438 = vpop.trf.xlu0
        %v439 = vpop.trf.xlu0
        %v440 = vpop.trf.xlu0
        %v441 = vpop.trf.xlu0
        %v442 = vpop.trf.xlu0
        %v443 = vpop.trf.xlu0
        %v444 = vpop.trf.xlu0
        %v445 = vpop.trf.xlu0
        %v446 = vpop.trf.xlu0
        %v447 = vpop.trf.xlu0
        %v448 = vpop.trf.xlu0
        %v449 = vpop.trf.xlu0
        %v450 = vpop.trf.xlu0
        %v451 = vpop.trf.xlu0
        %v452 = vpop.trf.xlu0
        %453 = vxpose.xlu0.b32.start [1/16] %v293, 128
        %454 = vxpose.xlu0.b32.cont [2/16] %v294, 128
        %455 = vxpose.xlu0.b32.cont [3/16] %v295, 128
        %456 = vxpose.xlu0.b32.cont [4/16] %v296, 128
        %457 = vxpose.xlu0.b32.cont [5/16] %v297, 128
        %458 = vxpose.xlu0.b32.cont [6/16] %v298, 128
        %459 = vxpose.xlu0.b32.cont [7/16] %v299, 128
        %460 = vxpose.xlu0.b32.cont [8/16] %v300, 128
        %461 = vxpose.xlu0.b32.cont [9/16] %v301, 128
        %462 = vxpose.xlu0.b32.cont [10/16] %v302, 128
        %463 = vxpose.xlu0.b32.cont [11/16] %v303, 128
        %464 = vxpose.xlu0.b32.cont [12/16] %v304, 128
        %465 = vxpose.xlu0.b32.cont [13/16] %v305, 128
        %466 = vxpose.xlu0.b32.cont [14/16] %v306, 128
        %467 = vxpose.xlu0.b32.cont [15/16] %v307, 128
        %468 = vxpose.xlu0.b32.end [16/16] %v308, 128
        %v469 = vpop.trf.xlu0
        %v470 = vpop.trf.xlu0
        %v471 = vpop.trf.xlu0
        %v472 = vpop.trf.xlu0
        %v473 = vpop.trf.xlu0
        %v474 = vpop.trf.xlu0
        %v475 = vpop.trf.xlu0
        %v476 = vpop.trf.xlu0
        %v477 = vpop.trf.xlu0
        %v478 = vpop.trf.xlu0
        %v479 = vpop.trf.xlu0
        %v480 = vpop.trf.xlu0
        %v481 = vpop.trf.xlu0
        %v482 = vpop.trf.xlu0
        %v483 = vpop.trf.xlu0
        %v484 = vpop.trf.xlu0
        %485 = vxpose.xlu0.b32.start [1/16] %v309, 128
        %486 = vxpose.xlu0.b32.cont [2/16] %v310, 128
        %487 = vxpose.xlu0.b32.cont [3/16] %v311, 128
        %488 = vxpose.xlu0.b32.cont [4/16] %v312, 128
        %489 = vxpose.xlu0.b32.cont [5/16] %v313, 128
        %490 = vxpose.xlu0.b32.cont [6/16] %v314, 128
        %491 = vxpose.xlu0.b32.cont [7/16] %v315, 128
        %492 = vxpose.xlu0.b32.cont [8/16] %v316, 128
        %493 = vxpose.xlu0.b32.cont [9/16] %v317, 128
        %494 = vxpose.xlu0.b32.cont [10/16] %v318, 128
        %495 = vxpose.xlu0.b32.cont [11/16] %v319, 128
        %496 = vxpose.xlu0.b32.cont [12/16] %v320, 128
        %497 = vxpose.xlu0.b32.cont [13/16] %v321, 128
        %498 = vxpose.xlu0.b32.cont [14/16] %v322, 128
        %499 = vxpose.xlu0.b32.cont [15/16] %v323, 128
        %500 = vxpose.xlu0.b32.end [16/16] %v324, 128
        %v501 = vpop.trf.xlu0
        %v502 = vpop.trf.xlu0
        %v503 = vpop.trf.xlu0
        %v504 = vpop.trf.xlu0
        %v505 = vpop.trf.xlu0
        %v506 = vpop.trf.xlu0
        %v507 = vpop.trf.xlu0
        %v508 = vpop.trf.xlu0
        %v509 = vpop.trf.xlu0
        %v510 = vpop.trf.xlu0
        %v511 = vpop.trf.xlu0
        %v512 = vpop.trf.xlu0
        %v513 = vpop.trf.xlu0
        %v514 = vpop.trf.xlu0
        %v515 = vpop.trf.xlu0
        %v516 = vpop.trf.xlu0
        %517 = vxpose.xlu0.b32.start [1/16] %v325, 128
        %518 = vxpose.xlu0.b32.cont [2/16] %v326, 128
        %519 = vxpose.xlu0.b32.cont [3/16] %v327, 128
        %520 = vxpose.xlu0.b32.cont [4/16] %v328, 128
        %521 = vxpose.xlu0.b32.cont [5/16] %v329, 128
        %522 = vxpose.xlu0.b32.cont [6/16] %v330, 128
        %523 = vxpose.xlu0.b32.cont [7/16] %v331, 128
        %524 = vxpose.xlu0.b32.cont [8/16] %v332, 128
        %525 = vxpose.xlu0.b32.cont [9/16] %v333, 128
        %526 = vxpose.xlu0.b32.cont [10/16] %v334, 128
        %527 = vxpose.xlu0.b32.cont [11/16] %v335, 128
        %528 = vxpose.xlu0.b32.cont [12/16] %v336, 128
        %529 = vxpose.xlu0.b32.cont [13/16] %v337, 128
        %530 = vxpose.xlu0.b32.cont [14/16] %v338, 128
        %531 = vxpose.xlu0.b32.cont [15/16] %v339, 128
        %532 = vxpose.xlu0.b32.end [16/16] %v340, 128
        %v533 = vpop.trf.xlu0
        %v534 = vpop.trf.xlu0
        %v535 = vpop.trf.xlu0
        %v536 = vpop.trf.xlu0
        %v537 = vpop.trf.xlu0
        %v538 = vpop.trf.xlu0
        %v539 = vpop.trf.xlu0
        %v540 = vpop.trf.xlu0
        %v541 = vpop.trf.xlu0
        %v542 = vpop.trf.xlu0
        %v543 = vpop.trf.xlu0
        %v544 = vpop.trf.xlu0
        %v545 = vpop.trf.xlu0
        %v546 = vpop.trf.xlu0
        %v547 = vpop.trf.xlu0
        %v548 = vpop.trf.xlu0
        %549 = vxpose.xlu0.b32.start [1/16] %v341, 128
        %550 = vxpose.xlu0.b32.cont [2/16] %v342, 128
        %551 = vxpose.xlu0.b32.cont [3/16] %v343, 128
        %552 = vxpose.xlu0.b32.cont [4/16] %v344, 128
        %553 = vxpose.xlu0.b32.cont [5/16] %v345, 128
        %554 = vxpose.xlu0.b32.cont [6/16] %v346, 128
        %555 = vxpose.xlu0.b32.cont [7/16] %v347, 128
        %556 = vxpose.xlu0.b32.cont [8/16] %v348, 128
        %557 = vxpose.xlu0.b32.cont [9/16] %v349, 128
        %558 = vxpose.xlu0.b32.cont [10/16] %v350, 128
        %559 = vxpose.xlu0.b32.cont [11/16] %v351, 128
        %560 = vxpose.xlu0.b32.cont [12/16] %v352, 128
        %561 = vxpose.xlu0.b32.cont [13/16] %v353, 128
        %562 = vxpose.xlu0.b32.cont [14/16] %v354, 128
        %563 = vxpose.xlu0.b32.cont [15/16] %v355, 128
        %564 = vxpose.xlu0.b32.end [16/16] %v356, 128
        %v565 = vpop.trf.xlu0
        %v566 = vpop.trf.xlu0
        %v567 = vpop.trf.xlu0
        %v568 = vpop.trf.xlu0
        %v569 = vpop.trf.xlu0
        %v570 = vpop.trf.xlu0
        %v571 = vpop.trf.xlu0
        %v572 = vpop.trf.xlu0
        %v573 = vpop.trf.xlu0
        %v574 = vpop.trf.xlu0
        %v575 = vpop.trf.xlu0
        %v576 = vpop.trf.xlu0
        %v577 = vpop.trf.xlu0
        %v578 = vpop.trf.xlu0
        %v579 = vpop.trf.xlu0
        %v580 = vpop.trf.xlu0
        %581 = vxpose.xlu0.b32.start [1/16] %v357, 128
        %582 = vxpose.xlu0.b32.cont [2/16] %v358, 128
        %583 = vxpose.xlu0.b32.cont [3/16] %v359, 128
        %584 = vxpose.xlu0.b32.cont [4/16] %v360, 128
        %585 = vxpose.xlu0.b32.cont [5/16] %v361, 128
        %586 = vxpose.xlu0.b32.cont [6/16] %v362, 128
        %587 = vxpose.xlu0.b32.cont [7/16] %v363, 128
        %588 = vxpose.xlu0.b32.cont [8/16] %v364, 128
        %589 = vxpose.xlu0.b32.cont [9/16] %v365, 128
        %590 = vxpose.xlu0.b32.cont [10/16] %v366, 128
        %591 = vxpose.xlu0.b32.cont [11/16] %v367, 128
        %592 = vxpose.xlu0.b32.cont [12/16] %v368, 128
        %593 = vxpose.xlu0.b32.cont [13/16] %v369, 128
        %594 = vxpose.xlu0.b32.cont [14/16] %v370, 128
        %595 = vxpose.xlu0.b32.cont [15/16] %v371, 128
        %596 = vxpose.xlu0.b32.end [16/16] %v372, 128
        %v597 = vpop.trf.xlu0
        %v598 = vpop.trf.xlu0
        %v599 = vpop.trf.xlu0
        %v600 = vpop.trf.xlu0
        %v601 = vpop.trf.xlu0
        %v602 = vpop.trf.xlu0
        %v603 = vpop.trf.xlu0
        %v604 = vpop.trf.xlu0
        %v605 = vpop.trf.xlu0
        %v606 = vpop.trf.xlu0
        %v607 = vpop.trf.xlu0
        %v608 = vpop.trf.xlu0
        %v609 = vpop.trf.xlu0
        %v610 = vpop.trf.xlu0
        %v611 = vpop.trf.xlu0
        %v612 = vpop.trf.xlu0
        %613 = vxpose.xlu0.b32.start [1/16] %v373, 128
        %614 = vxpose.xlu0.b32.cont [2/16] %v374, 128
        %615 = vxpose.xlu0.b32.cont [3/16] %v375, 128
        %616 = vxpose.xlu0.b32.cont [4/16] %v376, 128
        %617 = vxpose.xlu0.b32.cont [5/16] %v377, 128
        %618 = vxpose.xlu0.b32.cont [6/16] %v378, 128
        %619 = vxpose.xlu0.b32.cont [7/16] %v379, 128
        %620 = vxpose.xlu0.b32.cont [8/16] %v380, 128
        %621 = vxpose.xlu0.b32.cont [9/16] %v381, 128
        %622 = vxpose.xlu0.b32.cont [10/16] %v382, 128
        %623 = vxpose.xlu0.b32.cont [11/16] %v383, 128
        %624 = vxpose.xlu0.b32.cont [12/16] %v384, 128
        %625 = vxpose.xlu0.b32.cont [13/16] %v385, 128
        %626 = vxpose.xlu0.b32.cont [14/16] %v386, 128
        %627 = vxpose.xlu0.b32.cont [15/16] %v387, 128
        %628 = vxpose.xlu0.b32.end [16/16] %v388, 128
        %v629 = vpop.trf.xlu0
        %v630 = vpop.trf.xlu0
        %v631 = vpop.trf.xlu0
        %v632 = vpop.trf.xlu0
        %v633 = vpop.trf.xlu0
        %v634 = vpop.trf.xlu0
        %v635 = vpop.trf.xlu0
        %v636 = vpop.trf.xlu0
        %v637 = vpop.trf.xlu0
        %v638 = vpop.trf.xlu0
        %v639 = vpop.trf.xlu0
        %v640 = vpop.trf.xlu0
        %v641 = vpop.trf.xlu0
        %v642 = vpop.trf.xlu0
        %v643 = vpop.trf.xlu0
        %v644 = vpop.trf.xlu0
        %v645 = vld [vmem:[%s1] sm:$0xff]
        %v646 = vld [vmem:[%s1 + $0x8] sm:$0xff]
        %v647 = vld [vmem:[%s1 + $0x10] sm:$0xff]
        %v648 = vld [vmem:[%s1 + $0x18] sm:$0xff]
        %v649 = vld [vmem:[%s2] sm:$0xff]
        %v650 = vld [vmem:[%s2 + $0x8] sm:$0xff]
        %v651 = vld [vmem:[%s2 + $0x10] sm:$0xff]
        %v652 = vld [vmem:[%s2 + $0x18] sm:$0xff]
        %654 = vset.pattern.permute.xlu0 0
        %655 = vperm.xlu0 %654, %v645
        %v656 = vpop.permute.xlu0 %655
        %659 = vset.pattern.permute.xlu0 0
        %660 = vperm.xlu0 %659, %v646
        %v661 = vpop.permute.xlu0 %660
        %664 = vset.pattern.permute.xlu0 0
        %665 = vperm.xlu0 %664, %v647
        %v666 = vpop.permute.xlu0 %665
        %669 = vset.pattern.permute.xlu0 0
        %670 = vperm.xlu0 %669, %v648
        %v671 = vpop.permute.xlu0 %670
        %v673 = vlaneseq
        %v674 = vshrl.u32 %v673, 7
        %v675 = vsub.s32 0, %v674
        %v676 = vrot.slane %v405, %v675
        %v677 = vlaneseq
        %v678 = vshrl.u32 %v677, 7
        %v679 = vsub.s32 0, %v678
        %v680 = vrot.slane %v437, %v679
        %v681 = vlaneseq
        %v682 = vshrl.u32 %v681, 7
        %v683 = vsub.s32 0, %v682
        %v684 = vrot.slane %v469, %v683
        %v685 = vlaneseq
        %v686 = vshrl.u32 %v685, 7
        %v687 = vsub.s32 0, %v686
        %v688 = vrot.slane %v501, %v687
        %v689 = vlaneseq
        %v690 = vshrl.u32 %v689, 7
        %v691 = vsub.s32 0, %v690
        %v692 = vrot.slane %v533, %v691
        %v693 = vlaneseq
        %v694 = vshrl.u32 %v693, 7
        %v695 = vsub.s32 0, %v694
        %v696 = vrot.slane %v565, %v695
        %v697 = vlaneseq
        %v698 = vshrl.u32 %v697, 7
        %v699 = vsub.s32 0, %v698
        %v700 = vrot.slane %v597, %v699
        %v701 = vlaneseq
        %v702 = vshrl.u32 %v701, 7
        %v703 = vsub.s32 0, %v702
        %v704 = vrot.slane %v629, %v703
        %v705 = vmul.f32 %v656, %v676
        %v706 = vmul.f32 %v656, %v680
        %v707 = vmul.f32 %v656, %v684
        %v708 = vmul.f32 %v656, %v688
        %v709 = vmul.f32 %v656, %v692
        %v710 = vmul.f32 %v656, %v696
        %v711 = vmul.f32 %v656, %v700
        %v712 = vmul.f32 %v656, %v704
        %v713 = vmul.f32 %v661, %v676
        %v714 = vmul.f32 %v661, %v680
        %v715 = vmul.f32 %v661, %v684
        %v716 = vmul.f32 %v661, %v688
        %v717 = vmul.f32 %v661, %v692
        %v718 = vmul.f32 %v661, %v696
        %v719 = vmul.f32 %v661, %v700
        %v720 = vmul.f32 %v661, %v704
        %v721 = vmul.f32 %v666, %v676
        %v722 = vmul.f32 %v666, %v680
        %v723 = vmul.f32 %v666, %v684
        %v724 = vmul.f32 %v666, %v688
        %v725 = vmul.f32 %v666, %v692
        %v726 = vmul.f32 %v666, %v696
        %v727 = vmul.f32 %v666, %v700
        %v728 = vmul.f32 %v666, %v704
        %v729 = vmul.f32 %v671, %v676
        %v730 = vmul.f32 %v671, %v680
        %v731 = vmul.f32 %v671, %v684
        %v732 = vmul.f32 %v671, %v688
        %v733 = vmul.f32 %v671, %v692
        %v734 = vmul.f32 %v671, %v696
        %v735 = vmul.f32 %v671, %v700
        %v736 = vmul.f32 %v671, %v704
        %738 = vset.pattern.permute.xlu0 0
        %739 = vperm.xlu0 %738, %v649
        %v740 = vpop.permute.xlu0 %739
        %743 = vset.pattern.permute.xlu0 0
        %744 = vperm.xlu0 %743, %v650
        %v745 = vpop.permute.xlu0 %744
        %748 = vset.pattern.permute.xlu0 0
        %749 = vperm.xlu0 %748, %v651
        %v750 = vpop.permute.xlu0 %749
        %753 = vset.pattern.permute.xlu0 0
        %754 = vperm.xlu0 %753, %v652
        %v755 = vpop.permute.xlu0 %754
        %v757 = vadd.f32 %v740, %v705
        %v758 = vadd.f32 %v740, %v706
        %v759 = vadd.f32 %v740, %v707
        %v760 = vadd.f32 %v740, %v708
        %v761 = vadd.f32 %v740, %v709
        %v762 = vadd.f32 %v740, %v710
        %v763 = vadd.f32 %v740, %v711
        %v764 = vadd.f32 %v740, %v712
        %v765 = vadd.f32 %v745, %v713
        %v766 = vadd.f32 %v745, %v714
        %v767 = vadd.f32 %v745, %v715
        %v768 = vadd.f32 %v745, %v716
        %v769 = vadd.f32 %v745, %v717
        %v770 = vadd.f32 %v745, %v718
        %v771 = vadd.f32 %v745, %v719
        %v772 = vadd.f32 %v745, %v720
        %v773 = vadd.f32 %v750, %v721
        %v774 = vadd.f32 %v750, %v722
        %v775 = vadd.f32 %v750, %v723
        %v776 = vadd.f32 %v750, %v724
        %v777 = vadd.f32 %v750, %v725
        %v778 = vadd.f32 %v750, %v726
        %v779 = vadd.f32 %v750, %v727
        %v780 = vadd.f32 %v750, %v728
        %v781 = vadd.f32 %v755, %v729
        %v782 = vadd.f32 %v755, %v730
        %v783 = vadd.f32 %v755, %v731
        %v784 = vadd.f32 %v755, %v732
        %v785 = vadd.f32 %v755, %v733
        %v786 = vadd.f32 %v755, %v734
        %v787 = vadd.f32 %v755, %v735
        %v788 = vadd.f32 %v755, %v736
        %789 = vset.pattern.permute.xlu0 1
        %790 = vperm.xlu0 %789, %v645
        %v791 = vpop.permute.xlu0 %790
        %793 = vset.pattern.permute.xlu0 1
        %794 = vperm.xlu0 %793, %v646
        %v795 = vpop.permute.xlu0 %794
        %797 = vset.pattern.permute.xlu0 1
        %798 = vperm.xlu0 %797, %v647
        %v799 = vpop.permute.xlu0 %798
        %801 = vset.pattern.permute.xlu0 1
        %802 = vperm.xlu0 %801, %v648
        %v803 = vpop.permute.xlu0 %802
        %v805 = vlaneseq
        %v806 = vshrl.u32 %v805, 7
        %v807 = vsub.s32 1, %v806
        %v808 = vrot.slane %v405, %v807
        %v809 = vlaneseq
        %v810 = vshrl.u32 %v809, 7
        %v811 = vsub.s32 1, %v810
        %v812 = vrot.slane %v437, %v811
        %v813 = vlaneseq
        %v814 = vshrl.u32 %v813, 7
        %v815 = vsub.s32 1, %v814
        %v816 = vrot.slane %v469, %v815
        %v817 = vlaneseq
        %v818 = vshrl.u32 %v817, 7
        %v819 = vsub.s32 1, %v818
        %v820 = vrot.slane %v501, %v819
        %v821 = vlaneseq
        %v822 = vshrl.u32 %v821, 7
        %v823 = vsub.s32 1, %v822
        %v824 = vrot.slane %v533, %v823
        %v825 = vlaneseq
        %v826 = vshrl.u32 %v825, 7
        %v827 = vsub.s32 1, %v826
        %v828 = vrot.slane %v565, %v827
        %v829 = vlaneseq
        %v830 = vshrl.u32 %v829, 7
        %v831 = vsub.s32 1, %v830
        %v832 = vrot.slane %v597, %v831
        %v833 = vlaneseq
        %v834 = vshrl.u32 %v833, 7
        %v835 = vsub.s32 1, %v834
        %v836 = vrot.slane %v629, %v835
        %v837 = vmul.f32 %v791, %v808
        %v838 = vmul.f32 %v791, %v812
        %v839 = vmul.f32 %v791, %v816
        %v840 = vmul.f32 %v791, %v820
        %v841 = vmul.f32 %v791, %v824
        %v842 = vmul.f32 %v791, %v828
        %v843 = vmul.f32 %v791, %v832
        %v844 = vmul.f32 %v791, %v836
        %v845 = vmul.f32 %v795, %v808
        %v846 = vmul.f32 %v795, %v812
        %v847 = vmul.f32 %v795, %v816
        %v848 = vmul.f32 %v795, %v820
        %v849 = vmul.f32 %v795, %v824
        %v850 = vmul.f32 %v795, %v828
        %v851 = vmul.f32 %v795, %v832
        %v852 = vmul.f32 %v795, %v836
        %v853 = vmul.f32 %v799, %v808
        %v854 = vmul.f32 %v799, %v812
        %v855 = vmul.f32 %v799, %v816
        %v856 = vmul.f32 %v799, %v820
        %v857 = vmul.f32 %v799, %v824
        %v858 = vmul.f32 %v799, %v828
        %v859 = vmul.f32 %v799, %v832
        %v860 = vmul.f32 %v799, %v836
        %v861 = vmul.f32 %v803, %v808
        %v862 = vmul.f32 %v803, %v812
        %v863 = vmul.f32 %v803, %v816
        %v864 = vmul.f32 %v803, %v820
        %v865 = vmul.f32 %v803, %v824
        %v866 = vmul.f32 %v803, %v828
        %v867 = vmul.f32 %v803, %v832
        %v868 = vmul.f32 %v803, %v836
        %v869 = vadd.f32 %v757, %v837
        %v870 = vadd.f32 %v758, %v838
        %v871 = vadd.f32 %v759, %v839
        %v872 = vadd.f32 %v760, %v840
        %v873 = vadd.f32 %v761, %v841
        %v874 = vadd.f32 %v762, %v842
        %v875 = vadd.f32 %v763, %v843
        %v876 = vadd.f32 %v764, %v844
        %v877 = vadd.f32 %v765, %v845
        %v878 = vadd.f32 %v766, %v846
        %v879 = vadd.f32 %v767, %v847
        %v880 = vadd.f32 %v768, %v848
        %v881 = vadd.f32 %v769, %v849
        %v882 = vadd.f32 %v770, %v850
        %v883 = vadd.f32 %v771, %v851
        %v884 = vadd.f32 %v772, %v852
        %v885 = vadd.f32 %v773, %v853
        %v886 = vadd.f32 %v774, %v854
        %v887 = vadd.f32 %v775, %v855
        %v888 = vadd.f32 %v776, %v856
        %v889 = vadd.f32 %v777, %v857
        %v890 = vadd.f32 %v778, %v858
        %v891 = vadd.f32 %v779, %v859
        %v892 = vadd.f32 %v780, %v860
        %v893 = vadd.f32 %v781, %v861
        %v894 = vadd.f32 %v782, %v862
        %v895 = vadd.f32 %v783, %v863
        %v896 = vadd.f32 %v784, %v864
        %v897 = vadd.f32 %v785, %v865
        %v898 = vadd.f32 %v786, %v866
        %v899 = vadd.f32 %v787, %v867
        %v900 = vadd.f32 %v788, %v868
        %901 = vset.pattern.permute.xlu0 2
        %902 = vperm.xlu0 %901, %v645
        %v903 = vpop.permute.xlu0 %902
        %905 = vset.pattern.permute.xlu0 2
        %906 = vperm.xlu0 %905, %v646
        %v907 = vpop.permute.xlu0 %906
        %909 = vset.pattern.permute.xlu0 2
        %910 = vperm.xlu0 %909, %v647
        %v911 = vpop.permute.xlu0 %910
        %913 = vset.pattern.permute.xlu0 2
        %914 = vperm.xlu0 %913, %v648
        %v915 = vpop.permute.xlu0 %914
        %v917 = vlaneseq
        %v918 = vshrl.u32 %v917, 7
        %v919 = vsub.s32 2, %v918
        %v920 = vrot.slane %v405, %v919
        %v921 = vlaneseq
        %v922 = vshrl.u32 %v921, 7
        %v923 = vsub.s32 2, %v922
        %v924 = vrot.slane %v437, %v923
        %v925 = vlaneseq
        %v926 = vshrl.u32 %v925, 7
        %v927 = vsub.s32 2, %v926
        %v928 = vrot.slane %v469, %v927
        %v929 = vlaneseq
        %v930 = vshrl.u32 %v929, 7
        %v931 = vsub.s32 2, %v930
        %v932 = vrot.slane %v501, %v931
        %v933 = vlaneseq
        %v934 = vshrl.u32 %v933, 7
        %v935 = vsub.s32 2, %v934
        %v936 = vrot.slane %v533, %v935
        %v937 = vlaneseq
        %v938 = vshrl.u32 %v937, 7
        %v939 = vsub.s32 2, %v938
        %v940 = vrot.slane %v565, %v939
        %v941 = vlaneseq
        %v942 = vshrl.u32 %v941, 7
        %v943 = vsub.s32 2, %v942
        %v944 = vrot.slane %v597, %v943
        %v945 = vlaneseq
        %v946 = vshrl.u32 %v945, 7
        %v947 = vsub.s32 2, %v946
        %v948 = vrot.slane %v629, %v947
        %v949 = vmul.f32 %v903, %v920
        %v950 = vmul.f32 %v903, %v924
        %v951 = vmul.f32 %v903, %v928
        %v952 = vmul.f32 %v903, %v932
        %v953 = vmul.f32 %v903, %v936
        %v954 = vmul.f32 %v903, %v940
        %v955 = vmul.f32 %v903, %v944
        %v956 = vmul.f32 %v903, %v948
        %v957 = vmul.f32 %v907, %v920
        %v958 = vmul.f32 %v907, %v924
        %v959 = vmul.f32 %v907, %v928
        %v960 = vmul.f32 %v907, %v932
        %v961 = vmul.f32 %v907, %v936
        %v962 = vmul.f32 %v907, %v940
        %v963 = vmul.f32 %v907, %v944
        %v964 = vmul.f32 %v907, %v948
        %v965 = vmul.f32 %v911, %v920
        %v966 = vmul.f32 %v911, %v924
        %v967 = vmul.f32 %v911, %v928
        %v968 = vmul.f32 %v911, %v932
        %v969 = vmul.f32 %v911, %v936
        %v970 = vmul.f32 %v911, %v940
        %v971 = vmul.f32 %v911, %v944
        %v972 = vmul.f32 %v911, %v948
        %v973 = vmul.f32 %v915, %v920
        %v974 = vmul.f32 %v915, %v924
        %v975 = vmul.f32 %v915, %v928
        %v976 = vmul.f32 %v915, %v932
        %v977 = vmul.f32 %v915, %v936
        %v978 = vmul.f32 %v915, %v940
        %v979 = vmul.f32 %v915, %v944
        %v980 = vmul.f32 %v915, %v948
        %v981 = vadd.f32 %v869, %v949
        %v982 = vadd.f32 %v870, %v950
        %v983 = vadd.f32 %v871, %v951
        %v984 = vadd.f32 %v872, %v952
        %v985 = vadd.f32 %v873, %v953
        %v986 = vadd.f32 %v874, %v954
        %v987 = vadd.f32 %v875, %v955
        %v988 = vadd.f32 %v876, %v956
        %v989 = vadd.f32 %v877, %v957
        %v990 = vadd.f32 %v878, %v958
        %v991 = vadd.f32 %v879, %v959
        %v992 = vadd.f32 %v880, %v960
        %v993 = vadd.f32 %v881, %v961
        %v994 = vadd.f32 %v882, %v962
        %v995 = vadd.f32 %v883, %v963
        %v996 = vadd.f32 %v884, %v964
        %v997 = vadd.f32 %v885, %v965
        %v998 = vadd.f32 %v886, %v966
        %v999 = vadd.f32 %v887, %v967
        %v1000 = vadd.f32 %v888, %v968
        %v1001 = vadd.f32 %v889, %v969
        %v1002 = vadd.f32 %v890, %v970
        %v1003 = vadd.f32 %v891, %v971
        %v1004 = vadd.f32 %v892, %v972
        %v1005 = vadd.f32 %v893, %v973
        %v1006 = vadd.f32 %v894, %v974
        %v1007 = vadd.f32 %v895, %v975
        %v1008 = vadd.f32 %v896, %v976
        %v1009 = vadd.f32 %v897, %v977
        %v1010 = vadd.f32 %v898, %v978
        %v1011 = vadd.f32 %v899, %v979
        %v1012 = vadd.f32 %v900, %v980
        %1013 = vset.pattern.permute.xlu0 3
        %1014 = vperm.xlu0 %1013, %v645
        %v1015 = vpop.permute.xlu0 %1014
        %1017 = vset.pattern.permute.xlu0 3
        %1018 = vperm.xlu0 %1017, %v646
        %v1019 = vpop.permute.xlu0 %1018
        %1021 = vset.pattern.permute.xlu0 3
        %1022 = vperm.xlu0 %1021, %v647
        %v1023 = vpop.permute.xlu0 %1022
        %1025 = vset.pattern.permute.xlu0 3
        %1026 = vperm.xlu0 %1025, %v648
        %v1027 = vpop.permute.xlu0 %1026
        %v1029 = vlaneseq
        %v1030 = vshrl.u32 %v1029, 7
        %v1031 = vsub.s32 3, %v1030
        %v1032 = vrot.slane %v405, %v1031
        %v1033 = vlaneseq
        %v1034 = vshrl.u32 %v1033, 7
        %v1035 = vsub.s32 3, %v1034
        %v1036 = vrot.slane %v437, %v1035
        %v1037 = vlaneseq
        %v1038 = vshrl.u32 %v1037, 7
        %v1039 = vsub.s32 3, %v1038
        %v1040 = vrot.slane %v469, %v1039
        %v1041 = vlaneseq
        %v1042 = vshrl.u32 %v1041, 7
        %v1043 = vsub.s32 3, %v1042
        %v1044 = vrot.slane %v501, %v1043
        %v1045 = vlaneseq
        %v1046 = vshrl.u32 %v1045, 7
        %v1047 = vsub.s32 3, %v1046
        %v1048 = vrot.slane %v533, %v1047
        %v1049 = vlaneseq
        %v1050 = vshrl.u32 %v1049, 7
        %v1051 = vsub.s32 3, %v1050
        %v1052 = vrot.slane %v565, %v1051
        %v1053 = vlaneseq
        %v1054 = vshrl.u32 %v1053, 7
        %v1055 = vsub.s32 3, %v1054
        %v1056 = vrot.slane %v597, %v1055
        %v1057 = vlaneseq
        %v1058 = vshrl.u32 %v1057, 7
        %v1059 = vsub.s32 3, %v1058
        %v1060 = vrot.slane %v629, %v1059
        %v1061 = vmul.f32 %v1015, %v1032
        %v1062 = vmul.f32 %v1015, %v1036
        %v1063 = vmul.f32 %v1015, %v1040
        %v1064 = vmul.f32 %v1015, %v1044
        %v1065 = vmul.f32 %v1015, %v1048
        %v1066 = vmul.f32 %v1015, %v1052
        %v1067 = vmul.f32 %v1015, %v1056
        %v1068 = vmul.f32 %v1015, %v1060
        %v1069 = vmul.f32 %v1019, %v1032
        %v1070 = vmul.f32 %v1019, %v1036
        %v1071 = vmul.f32 %v1019, %v1040
        %v1072 = vmul.f32 %v1019, %v1044
        %v1073 = vmul.f32 %v1019, %v1048
        %v1074 = vmul.f32 %v1019, %v1052
        %v1075 = vmul.f32 %v1019, %v1056
        %v1076 = vmul.f32 %v1019, %v1060
        %v1077 = vmul.f32 %v1023, %v1032
        %v1078 = vmul.f32 %v1023, %v1036
        %v1079 = vmul.f32 %v1023, %v1040
        %v1080 = vmul.f32 %v1023, %v1044
        %v1081 = vmul.f32 %v1023, %v1048
        %v1082 = vmul.f32 %v1023, %v1052
        %v1083 = vmul.f32 %v1023, %v1056
        %v1084 = vmul.f32 %v1023, %v1060
        %v1085 = vmul.f32 %v1027, %v1032
        %v1086 = vmul.f32 %v1027, %v1036
        %v1087 = vmul.f32 %v1027, %v1040
        %v1088 = vmul.f32 %v1027, %v1044
        %v1089 = vmul.f32 %v1027, %v1048
        %v1090 = vmul.f32 %v1027, %v1052
        %v1091 = vmul.f32 %v1027, %v1056
        %v1092 = vmul.f32 %v1027, %v1060
        %v1093 = vadd.f32 %v981, %v1061
        %v1094 = vadd.f32 %v982, %v1062
        %v1095 = vadd.f32 %v983, %v1063
        %v1096 = vadd.f32 %v984, %v1064
        %v1097 = vadd.f32 %v985, %v1065
        %v1098 = vadd.f32 %v986, %v1066
        %v1099 = vadd.f32 %v987, %v1067
        %v1100 = vadd.f32 %v988, %v1068
        %v1101 = vadd.f32 %v989, %v1069
        %v1102 = vadd.f32 %v990, %v1070
        %v1103 = vadd.f32 %v991, %v1071
        %v1104 = vadd.f32 %v992, %v1072
        %v1105 = vadd.f32 %v993, %v1073
        %v1106 = vadd.f32 %v994, %v1074
        %v1107 = vadd.f32 %v995, %v1075
        %v1108 = vadd.f32 %v996, %v1076
        %v1109 = vadd.f32 %v997, %v1077
        %v1110 = vadd.f32 %v998, %v1078
        %v1111 = vadd.f32 %v999, %v1079
        %v1112 = vadd.f32 %v1000, %v1080
        %v1113 = vadd.f32 %v1001, %v1081
        %v1114 = vadd.f32 %v1002, %v1082
        %v1115 = vadd.f32 %v1003, %v1083
        %v1116 = vadd.f32 %v1004, %v1084
        %v1117 = vadd.f32 %v1005, %v1085
        %v1118 = vadd.f32 %v1006, %v1086
        %v1119 = vadd.f32 %v1007, %v1087
        %v1120 = vadd.f32 %v1008, %v1088
        %v1121 = vadd.f32 %v1009, %v1089
        %v1122 = vadd.f32 %v1010, %v1090
        %v1123 = vadd.f32 %v1011, %v1091
        %v1124 = vadd.f32 %v1012, %v1092
        %1125 = vset.pattern.permute.xlu0 4
        %1126 = vperm.xlu0 %1125, %v645
        %v1127 = vpop.permute.xlu0 %1126
        %1129 = vset.pattern.permute.xlu0 4
        %1130 = vperm.xlu0 %1129, %v646
        %v1131 = vpop.permute.xlu0 %1130
        %1133 = vset.pattern.permute.xlu0 4
        %1134 = vperm.xlu0 %1133, %v647
        %v1135 = vpop.permute.xlu0 %1134
        %1137 = vset.pattern.permute.xlu0 4
        %1138 = vperm.xlu0 %1137, %v648
        %v1139 = vpop.permute.xlu0 %1138
        %v1141 = vlaneseq
        %v1142 = vshrl.u32 %v1141, 7
        %v1143 = vsub.s32 4, %v1142
        %v1144 = vrot.slane %v405, %v1143
        %v1145 = vlaneseq
        %v1146 = vshrl.u32 %v1145, 7
        %v1147 = vsub.s32 4, %v1146
        %v1148 = vrot.slane %v437, %v1147
        %v1149 = vlaneseq
        %v1150 = vshrl.u32 %v1149, 7
        %v1151 = vsub.s32 4, %v1150
        %v1152 = vrot.slane %v469, %v1151
        %v1153 = vlaneseq
        %v1154 = vshrl.u32 %v1153, 7
        %v1155 = vsub.s32 4, %v1154
        %v1156 = vrot.slane %v501, %v1155
        %v1157 = vlaneseq
        %v1158 = vshrl.u32 %v1157, 7
        %v1159 = vsub.s32 4, %v1158
        %v1160 = vrot.slane %v533, %v1159
        %v1161 = vlaneseq
        %v1162 = vshrl.u32 %v1161, 7
        %v1163 = vsub.s32 4, %v1162
        %v1164 = vrot.slane %v565, %v1163
        %v1165 = vlaneseq
        %v1166 = vshrl.u32 %v1165, 7
        %v1167 = vsub.s32 4, %v1166
        %v1168 = vrot.slane %v597, %v1167
        %v1169 = vlaneseq
        %v1170 = vshrl.u32 %v1169, 7
        %v1171 = vsub.s32 4, %v1170
        %v1172 = vrot.slane %v629, %v1171
        %v1173 = vmul.f32 %v1127, %v1144
        %v1174 = vmul.f32 %v1127, %v1148
        %v1175 = vmul.f32 %v1127, %v1152
        %v1176 = vmul.f32 %v1127, %v1156
        %v1177 = vmul.f32 %v1127, %v1160
        %v1178 = vmul.f32 %v1127, %v1164
        %v1179 = vmul.f32 %v1127, %v1168
        %v1180 = vmul.f32 %v1127, %v1172
        %v1181 = vmul.f32 %v1131, %v1144
        %v1182 = vmul.f32 %v1131, %v1148
        %v1183 = vmul.f32 %v1131, %v1152
        %v1184 = vmul.f32 %v1131, %v1156
        %v1185 = vmul.f32 %v1131, %v1160
        %v1186 = vmul.f32 %v1131, %v1164
        %v1187 = vmul.f32 %v1131, %v1168
        %v1188 = vmul.f32 %v1131, %v1172
        %v1189 = vmul.f32 %v1135, %v1144
        %v1190 = vmul.f32 %v1135, %v1148
        %v1191 = vmul.f32 %v1135, %v1152
        %v1192 = vmul.f32 %v1135, %v1156
        %v1193 = vmul.f32 %v1135, %v1160
        %v1194 = vmul.f32 %v1135, %v1164
        %v1195 = vmul.f32 %v1135, %v1168
        %v1196 = vmul.f32 %v1135, %v1172
        %v1197 = vmul.f32 %v1139, %v1144
        %v1198 = vmul.f32 %v1139, %v1148
        %v1199 = vmul.f32 %v1139, %v1152
        %v1200 = vmul.f32 %v1139, %v1156
        %v1201 = vmul.f32 %v1139, %v1160
        %v1202 = vmul.f32 %v1139, %v1164
        %v1203 = vmul.f32 %v1139, %v1168
        %v1204 = vmul.f32 %v1139, %v1172
        %v1205 = vadd.f32 %v1093, %v1173
        %v1206 = vadd.f32 %v1094, %v1174
        %v1207 = vadd.f32 %v1095, %v1175
        %v1208 = vadd.f32 %v1096, %v1176
        %v1209 = vadd.f32 %v1097, %v1177
        %v1210 = vadd.f32 %v1098, %v1178
        %v1211 = vadd.f32 %v1099, %v1179
        %v1212 = vadd.f32 %v1100, %v1180
        %v1213 = vadd.f32 %v1101, %v1181
        %v1214 = vadd.f32 %v1102, %v1182
        %v1215 = vadd.f32 %v1103, %v1183
        %v1216 = vadd.f32 %v1104, %v1184
        %v1217 = vadd.f32 %v1105, %v1185
        %v1218 = vadd.f32 %v1106, %v1186
        %v1219 = vadd.f32 %v1107, %v1187
        %v1220 = vadd.f32 %v1108, %v1188
        %v1221 = vadd.f32 %v1109, %v1189
        %v1222 = vadd.f32 %v1110, %v1190
        %v1223 = vadd.f32 %v1111, %v1191
        %v1224 = vadd.f32 %v1112, %v1192
        %v1225 = vadd.f32 %v1113, %v1193
        %v1226 = vadd.f32 %v1114, %v1194
        %v1227 = vadd.f32 %v1115, %v1195
        %v1228 = vadd.f32 %v1116, %v1196
        %v1229 = vadd.f32 %v1117, %v1197
        %v1230 = vadd.f32 %v1118, %v1198
        %v1231 = vadd.f32 %v1119, %v1199
        %v1232 = vadd.f32 %v1120, %v1200
        %v1233 = vadd.f32 %v1121, %v1201
        %v1234 = vadd.f32 %v1122, %v1202
        %v1235 = vadd.f32 %v1123, %v1203
        %v1236 = vadd.f32 %v1124, %v1204
        %1237 = vset.pattern.permute.xlu0 5
        %1238 = vperm.xlu0 %1237, %v645
        %v1239 = vpop.permute.xlu0 %1238
        %1241 = vset.pattern.permute.xlu0 5
        %1242 = vperm.xlu0 %1241, %v646
        %v1243 = vpop.permute.xlu0 %1242
        %1245 = vset.pattern.permute.xlu0 5
        %1246 = vperm.xlu0 %1245, %v647
        %v1247 = vpop.permute.xlu0 %1246
        %1249 = vset.pattern.permute.xlu0 5
        %1250 = vperm.xlu0 %1249, %v648
        %v1251 = vpop.permute.xlu0 %1250
        %v1253 = vlaneseq
        %v1254 = vshrl.u32 %v1253, 7
        %v1255 = vsub.s32 5, %v1254
        %v1256 = vrot.slane %v405, %v1255
        %v1257 = vlaneseq
        %v1258 = vshrl.u32 %v1257, 7
        %v1259 = vsub.s32 5, %v1258
        %v1260 = vrot.slane %v437, %v1259
        %v1261 = vlaneseq
        %v1262 = vshrl.u32 %v1261, 7
        %v1263 = vsub.s32 5, %v1262
        %v1264 = vrot.slane %v469, %v1263
        %v1265 = vlaneseq
        %v1266 = vshrl.u32 %v1265, 7
        %v1267 = vsub.s32 5, %v1266
        %v1268 = vrot.slane %v501, %v1267
        %v1269 = vlaneseq
        %v1270 = vshrl.u32 %v1269, 7
        %v1271 = vsub.s32 5, %v1270
        %v1272 = vrot.slane %v533, %v1271
        %v1273 = vlaneseq
        %v1274 = vshrl.u32 %v1273, 7
        %v1275 = vsub.s32 5, %v1274
        %v1276 = vrot.slane %v565, %v1275
        %v1277 = vlaneseq
        %v1278 = vshrl.u32 %v1277, 7
        %v1279 = vsub.s32 5, %v1278
        %v1280 = vrot.slane %v597, %v1279
        %v1281 = vlaneseq
        %v1282 = vshrl.u32 %v1281, 7
        %v1283 = vsub.s32 5, %v1282
        %v1284 = vrot.slane %v629, %v1283
        %v1285 = vmul.f32 %v1239, %v1256
        %v1286 = vmul.f32 %v1239, %v1260
        %v1287 = vmul.f32 %v1239, %v1264
        %v1288 = vmul.f32 %v1239, %v1268
        %v1289 = vmul.f32 %v1239, %v1272
        %v1290 = vmul.f32 %v1239, %v1276
        %v1291 = vmul.f32 %v1239, %v1280
        %v1292 = vmul.f32 %v1239, %v1284
        %v1293 = vmul.f32 %v1243, %v1256
        %v1294 = vmul.f32 %v1243, %v1260
        %v1295 = vmul.f32 %v1243, %v1264
        %v1296 = vmul.f32 %v1243, %v1268
        %v1297 = vmul.f32 %v1243, %v1272
        %v1298 = vmul.f32 %v1243, %v1276
        %v1299 = vmul.f32 %v1243, %v1280
        %v1300 = vmul.f32 %v1243, %v1284
        %v1301 = vmul.f32 %v1247, %v1256
        %v1302 = vmul.f32 %v1247, %v1260
        %v1303 = vmul.f32 %v1247, %v1264
        %v1304 = vmul.f32 %v1247, %v1268
        %v1305 = vmul.f32 %v1247, %v1272
        %v1306 = vmul.f32 %v1247, %v1276
        %v1307 = vmul.f32 %v1247, %v1280
        %v1308 = vmul.f32 %v1247, %v1284
        %v1309 = vmul.f32 %v1251, %v1256
        %v1310 = vmul.f32 %v1251, %v1260
        %v1311 = vmul.f32 %v1251, %v1264
        %v1312 = vmul.f32 %v1251, %v1268
        %v1313 = vmul.f32 %v1251, %v1272
        %v1314 = vmul.f32 %v1251, %v1276
        %v1315 = vmul.f32 %v1251, %v1280
        %v1316 = vmul.f32 %v1251, %v1284
        %v1317 = vadd.f32 %v1205, %v1285
        %v1318 = vadd.f32 %v1206, %v1286
        %v1319 = vadd.f32 %v1207, %v1287
        %v1320 = vadd.f32 %v1208, %v1288
        %v1321 = vadd.f32 %v1209, %v1289
        %v1322 = vadd.f32 %v1210, %v1290
        %v1323 = vadd.f32 %v1211, %v1291
        %v1324 = vadd.f32 %v1212, %v1292
        %v1325 = vadd.f32 %v1213, %v1293
        %v1326 = vadd.f32 %v1214, %v1294
        %v1327 = vadd.f32 %v1215, %v1295
        %v1328 = vadd.f32 %v1216, %v1296
        %v1329 = vadd.f32 %v1217, %v1297
        %v1330 = vadd.f32 %v1218, %v1298
        %v1331 = vadd.f32 %v1219, %v1299
        %v1332 = vadd.f32 %v1220, %v1300
        %v1333 = vadd.f32 %v1221, %v1301
        %v1334 = vadd.f32 %v1222, %v1302
        %v1335 = vadd.f32 %v1223, %v1303
        %v1336 = vadd.f32 %v1224, %v1304
        %v1337 = vadd.f32 %v1225, %v1305
        %v1338 = vadd.f32 %v1226, %v1306
        %v1339 = vadd.f32 %v1227, %v1307
        %v1340 = vadd.f32 %v1228, %v1308
        %v1341 = vadd.f32 %v1229, %v1309
        %v1342 = vadd.f32 %v1230, %v1310
        %v1343 = vadd.f32 %v1231, %v1311
        %v1344 = vadd.f32 %v1232, %v1312
        %v1345 = vadd.f32 %v1233, %v1313
        %v1346 = vadd.f32 %v1234, %v1314
        %v1347 = vadd.f32 %v1235, %v1315
        %v1348 = vadd.f32 %v1236, %v1316
        %1349 = vset.pattern.permute.xlu0 6
        %1350 = vperm.xlu0 %1349, %v645
        %v1351 = vpop.permute.xlu0 %1350
        %1353 = vset.pattern.permute.xlu0 6
        %1354 = vperm.xlu0 %1353, %v646
        %v1355 = vpop.permute.xlu0 %1354
        %1357 = vset.pattern.permute.xlu0 6
        %1358 = vperm.xlu0 %1357, %v647
        %v1359 = vpop.permute.xlu0 %1358
        %1361 = vset.pattern.permute.xlu0 6
        %1362 = vperm.xlu0 %1361, %v648
        %v1363 = vpop.permute.xlu0 %1362
        %v1365 = vlaneseq
        %v1366 = vshrl.u32 %v1365, 7
        %v1367 = vsub.s32 6, %v1366
        %v1368 = vrot.slane %v405, %v1367
        %v1369 = vlaneseq
        %v1370 = vshrl.u32 %v1369, 7
        %v1371 = vsub.s32 6, %v1370
        %v1372 = vrot.slane %v437, %v1371
        %v1373 = vlaneseq
        %v1374 = vshrl.u32 %v1373, 7
        %v1375 = vsub.s32 6, %v1374
        %v1376 = vrot.slane %v469, %v1375
        %v1377 = vlaneseq
        %v1378 = vshrl.u32 %v1377, 7
        %v1379 = vsub.s32 6, %v1378
        %v1380 = vrot.slane %v501, %v1379
        %v1381 = vlaneseq
        %v1382 = vshrl.u32 %v1381, 7
        %v1383 = vsub.s32 6, %v1382
        %v1384 = vrot.slane %v533, %v1383
        %v1385 = vlaneseq
        %v1386 = vshrl.u32 %v1385, 7
        %v1387 = vsub.s32 6, %v1386
        %v1388 = vrot.slane %v565, %v1387
        %v1389 = vlaneseq
        %v1390 = vshrl.u32 %v1389, 7
        %v1391 = vsub.s32 6, %v1390
        %v1392 = vrot.slane %v597, %v1391
        %v1393 = vlaneseq
        %v1394 = vshrl.u32 %v1393, 7
        %v1395 = vsub.s32 6, %v1394
        %v1396 = vrot.slane %v629, %v1395
        %v1397 = vmul.f32 %v1351, %v1368
        %v1398 = vmul.f32 %v1351, %v1372
        %v1399 = vmul.f32 %v1351, %v1376
        %v1400 = vmul.f32 %v1351, %v1380
        %v1401 = vmul.f32 %v1351, %v1384
        %v1402 = vmul.f32 %v1351, %v1388
        %v1403 = vmul.f32 %v1351, %v1392
        %v1404 = vmul.f32 %v1351, %v1396
        %v1405 = vmul.f32 %v1355, %v1368
        %v1406 = vmul.f32 %v1355, %v1372
        %v1407 = vmul.f32 %v1355, %v1376
        %v1408 = vmul.f32 %v1355, %v1380
        %v1409 = vmul.f32 %v1355, %v1384
        %v1410 = vmul.f32 %v1355, %v1388
        %v1411 = vmul.f32 %v1355, %v1392
        %v1412 = vmul.f32 %v1355, %v1396
        %v1413 = vmul.f32 %v1359, %v1368
        %v1414 = vmul.f32 %v1359, %v1372
        %v1415 = vmul.f32 %v1359, %v1376
        %v1416 = vmul.f32 %v1359, %v1380
        %v1417 = vmul.f32 %v1359, %v1384
        %v1418 = vmul.f32 %v1359, %v1388
        %v1419 = vmul.f32 %v1359, %v1392
        %v1420 = vmul.f32 %v1359, %v1396
        %v1421 = vmul.f32 %v1363, %v1368
        %v1422 = vmul.f32 %v1363, %v1372
        %v1423 = vmul.f32 %v1363, %v1376
        %v1424 = vmul.f32 %v1363, %v1380
        %v1425 = vmul.f32 %v1363, %v1384
        %v1426 = vmul.f32 %v1363, %v1388
        %v1427 = vmul.f32 %v1363, %v1392
        %v1428 = vmul.f32 %v1363, %v1396
        %v1429 = vadd.f32 %v1317, %v1397
        %v1430 = vadd.f32 %v1318, %v1398
        %v1431 = vadd.f32 %v1319, %v1399
        %v1432 = vadd.f32 %v1320, %v1400
        %v1433 = vadd.f32 %v1321, %v1401
        %v1434 = vadd.f32 %v1322, %v1402
        %v1435 = vadd.f32 %v1323, %v1403
        %v1436 = vadd.f32 %v1324, %v1404
        %v1437 = vadd.f32 %v1325, %v1405
        %v1438 = vadd.f32 %v1326, %v1406
        %v1439 = vadd.f32 %v1327, %v1407
        %v1440 = vadd.f32 %v1328, %v1408
        %v1441 = vadd.f32 %v1329, %v1409
        %v1442 = vadd.f32 %v1330, %v1410
        %v1443 = vadd.f32 %v1331, %v1411
        %v1444 = vadd.f32 %v1332, %v1412
        %v1445 = vadd.f32 %v1333, %v1413
        %v1446 = vadd.f32 %v1334, %v1414
        %v1447 = vadd.f32 %v1335, %v1415
        %v1448 = vadd.f32 %v1336, %v1416
        %v1449 = vadd.f32 %v1337, %v1417
        %v1450 = vadd.f32 %v1338, %v1418
        %v1451 = vadd.f32 %v1339, %v1419
        %v1452 = vadd.f32 %v1340, %v1420
        %v1453 = vadd.f32 %v1341, %v1421
        %v1454 = vadd.f32 %v1342, %v1422
        %v1455 = vadd.f32 %v1343, %v1423
        %v1456 = vadd.f32 %v1344, %v1424
        %v1457 = vadd.f32 %v1345, %v1425
        %v1458 = vadd.f32 %v1346, %v1426
        %v1459 = vadd.f32 %v1347, %v1427
        %v1460 = vadd.f32 %v1348, %v1428
        %1461 = vset.pattern.permute.xlu0 7
        %1462 = vperm.xlu0 %1461, %v645
        %v1463 = vpop.permute.xlu0 %1462
        %1465 = vset.pattern.permute.xlu0 7
        %1466 = vperm.xlu0 %1465, %v646
        %v1467 = vpop.permute.xlu0 %1466
        %1469 = vset.pattern.permute.xlu0 7
        %1470 = vperm.xlu0 %1469, %v647
        %v1471 = vpop.permute.xlu0 %1470
        %1473 = vset.pattern.permute.xlu0 7
        %1474 = vperm.xlu0 %1473, %v648
        %v1475 = vpop.permute.xlu0 %1474
        %v1477 = vlaneseq
        %v1478 = vshrl.u32 %v1477, 7
        %v1479 = vsub.s32 7, %v1478
        %v1480 = vrot.slane %v405, %v1479
        %v1481 = vlaneseq
        %v1482 = vshrl.u32 %v1481, 7
        %v1483 = vsub.s32 7, %v1482
        %v1484 = vrot.slane %v437, %v1483
        %v1485 = vlaneseq
        %v1486 = vshrl.u32 %v1485, 7
        %v1487 = vsub.s32 7, %v1486
        %v1488 = vrot.slane %v469, %v1487
        %v1489 = vlaneseq
        %v1490 = vshrl.u32 %v1489, 7
        %v1491 = vsub.s32 7, %v1490
        %v1492 = vrot.slane %v501, %v1491
        %v1493 = vlaneseq
        %v1494 = vshrl.u32 %v1493, 7
        %v1495 = vsub.s32 7, %v1494
        %v1496 = vrot.slane %v533, %v1495
        %v1497 = vlaneseq
        %v1498 = vshrl.u32 %v1497, 7
        %v1499 = vsub.s32 7, %v1498
        %v1500 = vrot.slane %v565, %v1499
        %v1501 = vlaneseq
        %v1502 = vshrl.u32 %v1501, 7
        %v1503 = vsub.s32 7, %v1502
        %v1504 = vrot.slane %v597, %v1503
        %v1505 = vlaneseq
        %v1506 = vshrl.u32 %v1505, 7
        %v1507 = vsub.s32 7, %v1506
        %v1508 = vrot.slane %v629, %v1507
        %v1509 = vmul.f32 %v1463, %v1480
        %v1510 = vmul.f32 %v1463, %v1484
        %v1511 = vmul.f32 %v1463, %v1488
        %v1512 = vmul.f32 %v1463, %v1492
        %v1513 = vmul.f32 %v1463, %v1496
        %v1514 = vmul.f32 %v1463, %v1500
        %v1515 = vmul.f32 %v1463, %v1504
        %v1516 = vmul.f32 %v1463, %v1508
        %v1517 = vmul.f32 %v1467, %v1480
        %v1518 = vmul.f32 %v1467, %v1484
        %v1519 = vmul.f32 %v1467, %v1488
        %v1520 = vmul.f32 %v1467, %v1492
        %v1521 = vmul.f32 %v1467, %v1496
        %v1522 = vmul.f32 %v1467, %v1500
        %v1523 = vmul.f32 %v1467, %v1504
        %v1524 = vmul.f32 %v1467, %v1508
        %v1525 = vmul.f32 %v1471, %v1480
        %v1526 = vmul.f32 %v1471, %v1484
        %v1527 = vmul.f32 %v1471, %v1488
        %v1528 = vmul.f32 %v1471, %v1492
        %v1529 = vmul.f32 %v1471, %v1496
        %v1530 = vmul.f32 %v1471, %v1500
        %v1531 = vmul.f32 %v1471, %v1504
        %v1532 = vmul.f32 %v1471, %v1508
        %v1533 = vmul.f32 %v1475, %v1480
        %v1534 = vmul.f32 %v1475, %v1484
        %v1535 = vmul.f32 %v1475, %v1488
        %v1536 = vmul.f32 %v1475, %v1492
        %v1537 = vmul.f32 %v1475, %v1496
        %v1538 = vmul.f32 %v1475, %v1500
        %v1539 = vmul.f32 %v1475, %v1504
        %v1540 = vmul.f32 %v1475, %v1508
        %v1541 = vadd.f32 %v1429, %v1509
        %v1542 = vadd.f32 %v1430, %v1510
        %v1543 = vadd.f32 %v1431, %v1511
        %v1544 = vadd.f32 %v1432, %v1512
        %v1545 = vadd.f32 %v1433, %v1513
        %v1546 = vadd.f32 %v1434, %v1514
        %v1547 = vadd.f32 %v1435, %v1515
        %v1548 = vadd.f32 %v1436, %v1516
        %v1549 = vadd.f32 %v1437, %v1517
        %v1550 = vadd.f32 %v1438, %v1518
        %v1551 = vadd.f32 %v1439, %v1519
        %v1552 = vadd.f32 %v1440, %v1520
        %v1553 = vadd.f32 %v1441, %v1521
        %v1554 = vadd.f32 %v1442, %v1522
        %v1555 = vadd.f32 %v1443, %v1523
        %v1556 = vadd.f32 %v1444, %v1524
        %v1557 = vadd.f32 %v1445, %v1525
        %v1558 = vadd.f32 %v1446, %v1526
        %v1559 = vadd.f32 %v1447, %v1527
        %v1560 = vadd.f32 %v1448, %v1528
        %v1561 = vadd.f32 %v1449, %v1529
        %v1562 = vadd.f32 %v1450, %v1530
        %v1563 = vadd.f32 %v1451, %v1531
        %v1564 = vadd.f32 %v1452, %v1532
        %v1565 = vadd.f32 %v1453, %v1533
        %v1566 = vadd.f32 %v1454, %v1534
        %v1567 = vadd.f32 %v1455, %v1535
        %v1568 = vadd.f32 %v1456, %v1536
        %v1569 = vadd.f32 %v1457, %v1537
        %v1570 = vadd.f32 %v1458, %v1538
        %v1571 = vadd.f32 %v1459, %v1539
        %v1572 = vadd.f32 %v1460, %v1540
        %1573 = vxpose.xlu0.b32.start [1/16] %v1541, 128
        %1574 = vxpose.xlu0.b32.cont [2/16] %v1549, 128
        %1575 = vxpose.xlu0.b32.cont [3/16] %v1557, 128
        %1576 = vxpose.xlu0.b32.cont [4/16] %v1565, 128
        %1577 = vxpose.xlu0.b32.cont [5/16] 0.0, 128
        %1578 = vxpose.xlu0.b32.cont [6/16] 0.0, 128
        %1579 = vxpose.xlu0.b32.cont [7/16] 0.0, 128
        %1580 = vxpose.xlu0.b32.cont [8/16] 0.0, 128
        %1581 = vxpose.xlu0.b32.cont [9/16] 0.0, 128
        %1582 = vxpose.xlu0.b32.cont [10/16] 0.0, 128
        %1583 = vxpose.xlu0.b32.cont [11/16] 0.0, 128
        %1584 = vxpose.xlu0.b32.cont [12/16] 0.0, 128
        %1585 = vxpose.xlu0.b32.cont [13/16] 0.0, 128
        %1586 = vxpose.xlu0.b32.cont [14/16] 0.0, 128
        %1587 = vxpose.xlu0.b32.cont [15/16] 0.0, 128
        %1588 = vxpose.xlu0.b32.end [16/16] 0.0, 128
        %v1589 = vpop.trf.xlu0
        %v1590 = vpop.trf.xlu0
        %v1591 = vpop.trf.xlu0
        %v1592 = vpop.trf.xlu0
        %v1593 = vpop.trf.xlu0
        %v1594 = vpop.trf.xlu0
        %v1595 = vpop.trf.xlu0
        %v1596 = vpop.trf.xlu0
        %v1597 = vpop.trf.xlu0
        %v1598 = vpop.trf.xlu0
        %v1599 = vpop.trf.xlu0
        %v1600 = vpop.trf.xlu0
        %v1601 = vpop.trf.xlu0
        %v1602 = vpop.trf.xlu0
        %v1603 = vpop.trf.xlu0
        %v1604 = vpop.trf.xlu0
        %1605 = vxpose.xlu0.b32.start [1/16] %v1542, 128
        %1606 = vxpose.xlu0.b32.cont [2/16] %v1550, 128
        %1607 = vxpose.xlu0.b32.cont [3/16] %v1558, 128
        %1608 = vxpose.xlu0.b32.cont [4/16] %v1566, 128
        %1609 = vxpose.xlu0.b32.cont [5/16] 0.0, 128
        %1610 = vxpose.xlu0.b32.cont [6/16] 0.0, 128
        %1611 = vxpose.xlu0.b32.cont [7/16] 0.0, 128
        %1612 = vxpose.xlu0.b32.cont [8/16] 0.0, 128
        %1613 = vxpose.xlu0.b32.cont [9/16] 0.0, 128
        %1614 = vxpose.xlu0.b32.cont [10/16] 0.0, 128
        %1615 = vxpose.xlu0.b32.cont [11/16] 0.0, 128
        %1616 = vxpose.xlu0.b32.cont [12/16] 0.0, 128
        %1617 = vxpose.xlu0.b32.cont [13/16] 0.0, 128
        %1618 = vxpose.xlu0.b32.cont [14/16] 0.0, 128
        %1619 = vxpose.xlu0.b32.cont [15/16] 0.0, 128
        %1620 = vxpose.xlu0.b32.end [16/16] 0.0, 128
        %v1621 = vpop.trf.xlu0
        %v1622 = vpop.trf.xlu0
        %v1623 = vpop.trf.xlu0
        %v1624 = vpop.trf.xlu0
        %v1625 = vpop.trf.xlu0
        %v1626 = vpop.trf.xlu0
        %v1627 = vpop.trf.xlu0
        %v1628 = vpop.trf.xlu0
        %v1629 = vpop.trf.xlu0
        %v1630 = vpop.trf.xlu0
        %v1631 = vpop.trf.xlu0
        %v1632 = vpop.trf.xlu0
        %v1633 = vpop.trf.xlu0
        %v1634 = vpop.trf.xlu0
        %v1635 = vpop.trf.xlu0
        %v1636 = vpop.trf.xlu0
        %1637 = vxpose.xlu0.b32.start [1/16] %v1543, 128
        %1638 = vxpose.xlu0.b32.cont [2/16] %v1551, 128
        %1639 = vxpose.xlu0.b32.cont [3/16] %v1559, 128
        %1640 = vxpose.xlu0.b32.cont [4/16] %v1567, 128
        %1641 = vxpose.xlu0.b32.cont [5/16] 0.0, 128
        %1642 = vxpose.xlu0.b32.cont [6/16] 0.0, 128
        %1643 = vxpose.xlu0.b32.cont [7/16] 0.0, 128
        %1644 = vxpose.xlu0.b32.cont [8/16] 0.0, 128
        %1645 = vxpose.xlu0.b32.cont [9/16] 0.0, 128
        %1646 = vxpose.xlu0.b32.cont [10/16] 0.0, 128
        %1647 = vxpose.xlu0.b32.cont [11/16] 0.0, 128
        %1648 = vxpose.xlu0.b32.cont [12/16] 0.0, 128
        %1649 = vxpose.xlu0.b32.cont [13/16] 0.0, 128
        %1650 = vxpose.xlu0.b32.cont [14/16] 0.0, 128
        %1651 = vxpose.xlu0.b32.cont [15/16] 0.0, 128
        %1652 = vxpose.xlu0.b32.end [16/16] 0.0, 128
        %v1653 = vpop.trf.xlu0
        %v1654 = vpop.trf.xlu0
        %v1655 = vpop.trf.xlu0
        %v1656 = vpop.trf.xlu0
        %v1657 = vpop.trf.xlu0
        %v1658 = vpop.trf.xlu0
        %v1659 = vpop.trf.xlu0
        %v1660 = vpop.trf.xlu0
        %v1661 = vpop.trf.xlu0
        %v1662 = vpop.trf.xlu0
        %v1663 = vpop.trf.xlu0
        %v1664 = vpop.trf.xlu0
        %v1665 = vpop.trf.xlu0
        %v1666 = vpop.trf.xlu0
        %v1667 = vpop.trf.xlu0
        %v1668 = vpop.trf.xlu0
        %1669 = vxpose.xlu0.b32.start [1/16] %v1544, 128
        %1670 = vxpose.xlu0.b32.cont [2/16] %v1552, 128
        %1671 = vxpose.xlu0.b32.cont [3/16] %v1560, 128
        %1672 = vxpose.xlu0.b32.cont [4/16] %v1568, 128
        %1673 = vxpose.xlu0.b32.cont [5/16] 0.0, 128
        %1674 = vxpose.xlu0.b32.cont [6/16] 0.0, 128
        %1675 = vxpose.xlu0.b32.cont [7/16] 0.0, 128
        %1676 = vxpose.xlu0.b32.cont [8/16] 0.0, 128
        %1677 = vxpose.xlu0.b32.cont [9/16] 0.0, 128
        %1678 = vxpose.xlu0.b32.cont [10/16] 0.0, 128
        %1679 = vxpose.xlu0.b32.cont [11/16] 0.0, 128
        %1680 = vxpose.xlu0.b32.cont [12/16] 0.0, 128
        %1681 = vxpose.xlu0.b32.cont [13/16] 0.0, 128
        %1682 = vxpose.xlu0.b32.cont [14/16] 0.0, 128
        %1683 = vxpose.xlu0.b32.cont [15/16] 0.0, 128
        %1684 = vxpose.xlu0.b32.end [16/16] 0.0, 128
        %v1685 = vpop.trf.xlu0
        %v1686 = vpop.trf.xlu0
        %v1687 = vpop.trf.xlu0
        %v1688 = vpop.trf.xlu0
        %v1689 = vpop.trf.xlu0
        %v1690 = vpop.trf.xlu0
        %v1691 = vpop.trf.xlu0
        %v1692 = vpop.trf.xlu0
        %v1693 = vpop.trf.xlu0
        %v1694 = vpop.trf.xlu0
        %v1695 = vpop.trf.xlu0
        %v1696 = vpop.trf.xlu0
        %v1697 = vpop.trf.xlu0
        %v1698 = vpop.trf.xlu0
        %v1699 = vpop.trf.xlu0
        %v1700 = vpop.trf.xlu0
        %1701 = vxpose.xlu0.b32.start [1/16] %v1545, 128
        %1702 = vxpose.xlu0.b32.cont [2/16] %v1553, 128
        %1703 = vxpose.xlu0.b32.cont [3/16] %v1561, 128
        %1704 = vxpose.xlu0.b32.cont [4/16] %v1569, 128
        %1705 = vxpose.xlu0.b32.cont [5/16] 0.0, 128
        %1706 = vxpose.xlu0.b32.cont [6/16] 0.0, 128
        %1707 = vxpose.xlu0.b32.cont [7/16] 0.0, 128
        %1708 = vxpose.xlu0.b32.cont [8/16] 0.0, 128
        %1709 = vxpose.xlu0.b32.cont [9/16] 0.0, 128
        %1710 = vxpose.xlu0.b32.cont [10/16] 0.0, 128
        %1711 = vxpose.xlu0.b32.cont [11/16] 0.0, 128
        %1712 = vxpose.xlu0.b32.cont [12/16] 0.0, 128
        %1713 = vxpose.xlu0.b32.cont [13/16] 0.0, 128
        %1714 = vxpose.xlu0.b32.cont [14/16] 0.0, 128
        %1715 = vxpose.xlu0.b32.cont [15/16] 0.0, 128
        %1716 = vxpose.xlu0.b32.end [16/16] 0.0, 128
        %v1717 = vpop.trf.xlu0
        %v1718 = vpop.trf.xlu0
        %v1719 = vpop.trf.xlu0
        %v1720 = vpop.trf.xlu0
        %v1721 = vpop.trf.xlu0
        %v1722 = vpop.trf.xlu0
        %v1723 = vpop.trf.xlu0
        %v1724 = vpop.trf.xlu0
        %v1725 = vpop.trf.xlu0
        %v1726 = vpop.trf.xlu0
        %v1727 = vpop.trf.xlu0
        %v1728 = vpop.trf.xlu0
        %v1729 = vpop.trf.xlu0
        %v1730 = vpop.trf.xlu0
        %v1731 = vpop.trf.xlu0
        %v1732 = vpop.trf.xlu0
        %1733 = vxpose.xlu0.b32.start [1/16] %v1546, 128
        %1734 = vxpose.xlu0.b32.cont [2/16] %v1554, 128
        %1735 = vxpose.xlu0.b32.cont [3/16] %v1562, 128
        %1736 = vxpose.xlu0.b32.cont [4/16] %v1570, 128
        %1737 = vxpose.xlu0.b32.cont [5/16] 0.0, 128
        %1738 = vxpose.xlu0.b32.cont [6/16] 0.0, 128
        %1739 = vxpose.xlu0.b32.cont [7/16] 0.0, 128
        %1740 = vxpose.xlu0.b32.cont [8/16] 0.0, 128
        %1741 = vxpose.xlu0.b32.cont [9/16] 0.0, 128
        %1742 = vxpose.xlu0.b32.cont [10/16] 0.0, 128
        %1743 = vxpose.xlu0.b32.cont [11/16] 0.0, 128
        %1744 = vxpose.xlu0.b32.cont [12/16] 0.0, 128
        %1745 = vxpose.xlu0.b32.cont [13/16] 0.0, 128
        %1746 = vxpose.xlu0.b32.cont [14/16] 0.0, 128
        %1747 = vxpose.xlu0.b32.cont [15/16] 0.0, 128
        %1748 = vxpose.xlu0.b32.end [16/16] 0.0, 128
        %v1749 = vpop.trf.xlu0
        %v1750 = vpop.trf.xlu0
        %v1751 = vpop.trf.xlu0
        %v1752 = vpop.trf.xlu0
        %v1753 = vpop.trf.xlu0
        %v1754 = vpop.trf.xlu0
        %v1755 = vpop.trf.xlu0
        %v1756 = vpop.trf.xlu0
        %v1757 = vpop.trf.xlu0
        %v1758 = vpop.trf.xlu0
        %v1759 = vpop.trf.xlu0
        %v1760 = vpop.trf.xlu0
        %v1761 = vpop.trf.xlu0
        %v1762 = vpop.trf.xlu0
        %v1763 = vpop.trf.xlu0
        %v1764 = vpop.trf.xlu0
        %1765 = vxpose.xlu0.b32.start [1/16] %v1547, 128
        %1766 = vxpose.xlu0.b32.cont [2/16] %v1555, 128
        %1767 = vxpose.xlu0.b32.cont [3/16] %v1563, 128
        %1768 = vxpose.xlu0.b32.cont [4/16] %v1571, 128
        %1769 = vxpose.xlu0.b32.cont [5/16] 0.0, 128
        %1770 = vxpose.xlu0.b32.cont [6/16] 0.0, 128
        %1771 = vxpose.xlu0.b32.cont [7/16] 0.0, 128
        %1772 = vxpose.xlu0.b32.cont [8/16] 0.0, 128
        %1773 = vxpose.xlu0.b32.cont [9/16] 0.0, 128
        %1774 = vxpose.xlu0.b32.cont [10/16] 0.0, 128
        %1775 = vxpose.xlu0.b32.cont [11/16] 0.0, 128
        %1776 = vxpose.xlu0.b32.cont [12/16] 0.0, 128
        %1777 = vxpose.xlu0.b32.cont [13/16] 0.0, 128
        %1778 = vxpose.xlu0.b32.cont [14/16] 0.0, 128
        %1779 = vxpose.xlu0.b32.cont [15/16] 0.0, 128
        %1780 = vxpose.xlu0.b32.end [16/16] 0.0, 128
        %v1781 = vpop.trf.xlu0
        %v1782 = vpop.trf.xlu0
        %v1783 = vpop.trf.xlu0
        %v1784 = vpop.trf.xlu0
        %v1785 = vpop.trf.xlu0
        %v1786 = vpop.trf.xlu0
        %v1787 = vpop.trf.xlu0
        %v1788 = vpop.trf.xlu0
        %v1789 = vpop.trf.xlu0
        %v1790 = vpop.trf.xlu0
        %v1791 = vpop.trf.xlu0
        %v1792 = vpop.trf.xlu0
        %v1793 = vpop.trf.xlu0
        %v1794 = vpop.trf.xlu0
        %v1795 = vpop.trf.xlu0
        %v1796 = vpop.trf.xlu0
        %1797 = vxpose.xlu0.b32.start [1/16] %v1548, 128
        %1798 = vxpose.xlu0.b32.cont [2/16] %v1556, 128
        %1799 = vxpose.xlu0.b32.cont [3/16] %v1564, 128
        %1800 = vxpose.xlu0.b32.cont [4/16] %v1572, 128
        %1801 = vxpose.xlu0.b32.cont [5/16] 0.0, 128
        %1802 = vxpose.xlu0.b32.cont [6/16] 0.0, 128
        %1803 = vxpose.xlu0.b32.cont [7/16] 0.0, 128
        %1804 = vxpose.xlu0.b32.cont [8/16] 0.0, 128
        %1805 = vxpose.xlu0.b32.cont [9/16] 0.0, 128
        %1806 = vxpose.xlu0.b32.cont [10/16] 0.0, 128
        %1807 = vxpose.xlu0.b32.cont [11/16] 0.0, 128
        %1808 = vxpose.xlu0.b32.cont [12/16] 0.0, 128
        %1809 = vxpose.xlu0.b32.cont [13/16] 0.0, 128
        %1810 = vxpose.xlu0.b32.cont [14/16] 0.0, 128
        %1811 = vxpose.xlu0.b32.cont [15/16] 0.0, 128
        %1812 = vxpose.xlu0.b32.end [16/16] 0.0, 128
        %v1813 = vpop.trf.xlu0
        %v1814 = vpop.trf.xlu0
        %v1815 = vpop.trf.xlu0
        %v1816 = vpop.trf.xlu0
        %v1817 = vpop.trf.xlu0
        %v1818 = vpop.trf.xlu0
        %v1819 = vpop.trf.xlu0
        %v1820 = vpop.trf.xlu0
        %v1821 = vpop.trf.xlu0
        %v1822 = vpop.trf.xlu0
        %v1823 = vpop.trf.xlu0
        %v1824 = vpop.trf.xlu0
        %v1825 = vpop.trf.xlu0
        %v1826 = vpop.trf.xlu0
        %v1827 = vpop.trf.xlu0
        %v1828 = vpop.trf.xlu0
        %v1829 = vld [vmem:[%s250] sm:$0xff]
        %v1830 = vld [vmem:[%s250 + $0x8] sm:$0xff]
        %v1831 = vld [vmem:[%s250 + $0x10] sm:$0xff]
        %v1832 = vld [vmem:[%s250 + $0x18] sm:$0xff]
        %v1833 = vld [vmem:[%s250 + $0x20] sm:$0xff]
        %v1834 = vld [vmem:[%s250 + $0x28] sm:$0xff]
        %v1835 = vld [vmem:[%s250 + $0x30] sm:$0xff]
        %v1836 = vld [vmem:[%s250 + $0x38] sm:$0xff]
        %v1837 = vld [vmem:[%s250 + $0x40] sm:$0xff]
        %v1838 = vld [vmem:[%s250 + $0x48] sm:$0xff]
        %v1839 = vld [vmem:[%s250 + $0x50] sm:$0xff]
        %v1840 = vld [vmem:[%s250 + $0x58] sm:$0xff]
        %v1841 = vld [vmem:[%s250 + $0x60] sm:$0xff]
        %v1842 = vld [vmem:[%s250 + $0x68] sm:$0xff]
        %v1843 = vld [vmem:[%s250 + $0x70] sm:$0xff]
        %v1844 = vld [vmem:[%s250 + $0x78] sm:$0xff]
        %v1845 = vld [vmem:[%s250 + $0x80] sm:$0xff]
        %v1846 = vld [vmem:[%s250 + $0x88] sm:$0xff]
        %v1847 = vld [vmem:[%s250 + $0x90] sm:$0xff]
        %v1848 = vld [vmem:[%s250 + $0x98] sm:$0xff]
        %v1849 = vld [vmem:[%s250 + $0xa0] sm:$0xff]
        %v1850 = vld [vmem:[%s250 + $0xa8] sm:$0xff]
        %v1851 = vld [vmem:[%s250 + $0xb0] sm:$0xff]
        %v1852 = vld [vmem:[%s250 + $0xb8] sm:$0xff]
        %v1853 = vld [vmem:[%s250 + $0xc0] sm:$0xff]
        %v1854 = vld [vmem:[%s250 + $0xc8] sm:$0xff]
        %v1855 = vld [vmem:[%s250 + $0xd0] sm:$0xff]
        %v1856 = vld [vmem:[%s250 + $0xd8] sm:$0xff]
        %v1857 = vld [vmem:[%s250 + $0xe0] sm:$0xff]
        %v1858 = vld [vmem:[%s250 + $0xe8] sm:$0xff]
        %v1859 = vld [vmem:[%s250 + $0xf0] sm:$0xff]
        %v1860 = vld [vmem:[%s250 + $0xf8] sm:$0xff]
        %v1861 = vld [vmem:[%s250 + $0x100] sm:$0xff]
        %v1862 = vld [vmem:[%s250 + $0x108] sm:$0xff]
        %v1863 = vld [vmem:[%s250 + $0x110] sm:$0xff]
        %v1864 = vld [vmem:[%s250 + $0x118] sm:$0xff]
        %v1865 = vld [vmem:[%s250 + $0x120] sm:$0xff]
        %v1866 = vld [vmem:[%s250 + $0x128] sm:$0xff]
        %v1867 = vld [vmem:[%s250 + $0x130] sm:$0xff]
        %v1868 = vld [vmem:[%s250 + $0x138] sm:$0xff]
        %v1869 = vld [vmem:[%s250 + $0x140] sm:$0xff]
        %v1870 = vld [vmem:[%s250 + $0x148] sm:$0xff]
        %v1871 = vld [vmem:[%s250 + $0x150] sm:$0xff]
        %v1872 = vld [vmem:[%s250 + $0x158] sm:$0xff]
        %v1873 = vld [vmem:[%s250 + $0x160] sm:$0xff]
        %v1874 = vld [vmem:[%s250 + $0x168] sm:$0xff]
        %v1875 = vld [vmem:[%s250 + $0x170] sm:$0xff]
        %v1876 = vld [vmem:[%s250 + $0x178] sm:$0xff]
        %v1877 = vld [vmem:[%s250 + $0x180] sm:$0xff]
        %v1878 = vld [vmem:[%s250 + $0x188] sm:$0xff]
        %v1879 = vld [vmem:[%s250 + $0x190] sm:$0xff]
        %v1880 = vld [vmem:[%s250 + $0x198] sm:$0xff]
        %v1881 = vld [vmem:[%s250 + $0x1a0] sm:$0xff]
        %v1882 = vld [vmem:[%s250 + $0x1a8] sm:$0xff]
        %v1883 = vld [vmem:[%s250 + $0x1b0] sm:$0xff]
        %v1884 = vld [vmem:[%s250 + $0x1b8] sm:$0xff]
        %v1885 = vld [vmem:[%s250 + $0x1c0] sm:$0xff]
        %v1886 = vld [vmem:[%s250 + $0x1c8] sm:$0xff]
        %v1887 = vld [vmem:[%s250 + $0x1d0] sm:$0xff]
        %v1888 = vld [vmem:[%s250 + $0x1d8] sm:$0xff]
        %v1889 = vld [vmem:[%s250 + $0x1e0] sm:$0xff]
        %v1890 = vld [vmem:[%s250 + $0x1e8] sm:$0xff]
        %v1891 = vld [vmem:[%s250 + $0x1f0] sm:$0xff]
        %v1892 = vld [vmem:[%s250 + $0x1f8] sm:$0xff]
        %v1893 = vld [vmem:[%s250 + $0x200] sm:$0xff]
        %v1894 = vld [vmem:[%s250 + $0x208] sm:$0xff]
        %v1895 = vld [vmem:[%s250 + $0x210] sm:$0xff]
        %v1896 = vld [vmem:[%s250 + $0x218] sm:$0xff]
        %v1897 = vld [vmem:[%s250 + $0x220] sm:$0xff]
        %v1898 = vld [vmem:[%s250 + $0x228] sm:$0xff]
        %v1899 = vld [vmem:[%s250 + $0x230] sm:$0xff]
        %v1900 = vld [vmem:[%s250 + $0x238] sm:$0xff]
        %v1901 = vld [vmem:[%s250 + $0x240] sm:$0xff]
        %v1902 = vld [vmem:[%s250 + $0x248] sm:$0xff]
        %v1903 = vld [vmem:[%s250 + $0x250] sm:$0xff]
        %v1904 = vld [vmem:[%s250 + $0x258] sm:$0xff]
        %v1905 = vld [vmem:[%s250 + $0x260] sm:$0xff]
        %v1906 = vld [vmem:[%s250 + $0x268] sm:$0xff]
        %v1907 = vld [vmem:[%s250 + $0x270] sm:$0xff]
        %v1908 = vld [vmem:[%s250 + $0x278] sm:$0xff]
        %v1909 = vld [vmem:[%s250 + $0x280] sm:$0xff]
        %v1910 = vld [vmem:[%s250 + $0x288] sm:$0xff]
        %v1911 = vld [vmem:[%s250 + $0x290] sm:$0xff]
        %v1912 = vld [vmem:[%s250 + $0x298] sm:$0xff]
        %v1913 = vld [vmem:[%s250 + $0x2a0] sm:$0xff]
        %v1914 = vld [vmem:[%s250 + $0x2a8] sm:$0xff]
        %v1915 = vld [vmem:[%s250 + $0x2b0] sm:$0xff]
        %v1916 = vld [vmem:[%s250 + $0x2b8] sm:$0xff]
        %v1917 = vld [vmem:[%s250 + $0x2c0] sm:$0xff]
        %v1918 = vld [vmem:[%s250 + $0x2c8] sm:$0xff]
        %v1919 = vld [vmem:[%s250 + $0x2d0] sm:$0xff]
        %v1920 = vld [vmem:[%s250 + $0x2d8] sm:$0xff]
        %v1921 = vld [vmem:[%s250 + $0x2e0] sm:$0xff]
        %v1922 = vld [vmem:[%s250 + $0x2e8] sm:$0xff]
        %v1923 = vld [vmem:[%s250 + $0x2f0] sm:$0xff]
        %v1924 = vld [vmem:[%s250 + $0x2f8] sm:$0xff]
        %v1925 = vld [vmem:[%s250 + $0x300] sm:$0xff]
        %v1926 = vld [vmem:[%s250 + $0x308] sm:$0xff]
        %v1927 = vld [vmem:[%s250 + $0x310] sm:$0xff]
        %v1928 = vld [vmem:[%s250 + $0x318] sm:$0xff]
        %v1929 = vld [vmem:[%s250 + $0x320] sm:$0xff]
        %v1930 = vld [vmem:[%s250 + $0x328] sm:$0xff]
        %v1931 = vld [vmem:[%s250 + $0x330] sm:$0xff]
        %v1932 = vld [vmem:[%s250 + $0x338] sm:$0xff]
        %v1933 = vld [vmem:[%s250 + $0x340] sm:$0xff]
        %v1934 = vld [vmem:[%s250 + $0x348] sm:$0xff]
        %v1935 = vld [vmem:[%s250 + $0x350] sm:$0xff]
        %v1936 = vld [vmem:[%s250 + $0x358] sm:$0xff]
        %v1937 = vld [vmem:[%s250 + $0x360] sm:$0xff]
        %v1938 = vld [vmem:[%s250 + $0x368] sm:$0xff]
        %v1939 = vld [vmem:[%s250 + $0x370] sm:$0xff]
        %v1940 = vld [vmem:[%s250 + $0x378] sm:$0xff]
        %v1941 = vld [vmem:[%s250 + $0x380] sm:$0xff]
        %v1942 = vld [vmem:[%s250 + $0x388] sm:$0xff]
        %v1943 = vld [vmem:[%s250 + $0x390] sm:$0xff]
        %v1944 = vld [vmem:[%s250 + $0x398] sm:$0xff]
        %v1945 = vld [vmem:[%s250 + $0x3a0] sm:$0xff]
        %v1946 = vld [vmem:[%s250 + $0x3a8] sm:$0xff]
        %v1947 = vld [vmem:[%s250 + $0x3b0] sm:$0xff]
        %v1948 = vld [vmem:[%s250 + $0x3b8] sm:$0xff]
        %v1949 = vld [vmem:[%s250 + $0x3c0] sm:$0xff]
        %v1950 = vld [vmem:[%s250 + $0x3c8] sm:$0xff]
        %v1951 = vld [vmem:[%s250 + $0x3d0] sm:$0xff]
        %v1952 = vld [vmem:[%s250 + $0x3d8] sm:$0xff]
        %v1953 = vld [vmem:[%s250 + $0x3e0] sm:$0xff]
        %v1954 = vld [vmem:[%s250 + $0x3e8] sm:$0xff]
        %v1955 = vld [vmem:[%s250 + $0x3f0] sm:$0xff]
        %v1956 = vld [vmem:[%s250 + $0x3f8] sm:$0xff]
        %v1957 = vsub.f32 %v1589, %v1829
        %v1958 = vsub.f32 %v1590, %v1830
        %v1959 = vsub.f32 %v1591, %v1831
        %v1960 = vsub.f32 %v1592, %v1832
        %v1961 = vsub.f32 %v1593, %v1833
        %v1962 = vsub.f32 %v1594, %v1834
        %v1963 = vsub.f32 %v1595, %v1835
        %v1964 = vsub.f32 %v1596, %v1836
        %v1965 = vsub.f32 %v1597, %v1837
        %v1966 = vsub.f32 %v1598, %v1838
        %v1967 = vsub.f32 %v1599, %v1839
        %v1968 = vsub.f32 %v1600, %v1840
        %v1969 = vsub.f32 %v1601, %v1841
        %v1970 = vsub.f32 %v1602, %v1842
        %v1971 = vsub.f32 %v1603, %v1843
        %v1972 = vsub.f32 %v1604, %v1844
        %v1973 = vsub.f32 %v1621, %v1845
        %v1974 = vsub.f32 %v1622, %v1846
        %v1975 = vsub.f32 %v1623, %v1847
        %v1976 = vsub.f32 %v1624, %v1848
        %v1977 = vsub.f32 %v1625, %v1849
        %v1978 = vsub.f32 %v1626, %v1850
        %v1979 = vsub.f32 %v1627, %v1851
        %v1980 = vsub.f32 %v1628, %v1852
        %v1981 = vsub.f32 %v1629, %v1853
        %v1982 = vsub.f32 %v1630, %v1854
        %v1983 = vsub.f32 %v1631, %v1855
        %v1984 = vsub.f32 %v1632, %v1856
        %v1985 = vsub.f32 %v1633, %v1857
        %v1986 = vsub.f32 %v1634, %v1858
        %v1987 = vsub.f32 %v1635, %v1859
        %v1988 = vsub.f32 %v1636, %v1860
        %v1989 = vsub.f32 %v1653, %v1861
        %v1990 = vsub.f32 %v1654, %v1862
        %v1991 = vsub.f32 %v1655, %v1863
        %v1992 = vsub.f32 %v1656, %v1864
        %v1993 = vsub.f32 %v1657, %v1865
        %v1994 = vsub.f32 %v1658, %v1866
        %v1995 = vsub.f32 %v1659, %v1867
        %v1996 = vsub.f32 %v1660, %v1868
        %v1997 = vsub.f32 %v1661, %v1869
        %v1998 = vsub.f32 %v1662, %v1870
        %v1999 = vsub.f32 %v1663, %v1871
        %v2000 = vsub.f32 %v1664, %v1872
        %v2001 = vsub.f32 %v1665, %v1873
        %v2002 = vsub.f32 %v1666, %v1874
        %v2003 = vsub.f32 %v1667, %v1875
        %v2004 = vsub.f32 %v1668, %v1876
        %v2005 = vsub.f32 %v1685, %v1877
        %v2006 = vsub.f32 %v1686, %v1878
        %v2007 = vsub.f32 %v1687, %v1879
        %v2008 = vsub.f32 %v1688, %v1880
        %v2009 = vsub.f32 %v1689, %v1881
        %v2010 = vsub.f32 %v1690, %v1882
        %v2011 = vsub.f32 %v1691, %v1883
        %v2012 = vsub.f32 %v1692, %v1884
        %v2013 = vsub.f32 %v1693, %v1885
        %v2014 = vsub.f32 %v1694, %v1886
        %v2015 = vsub.f32 %v1695, %v1887
        %v2016 = vsub.f32 %v1696, %v1888
        %v2017 = vsub.f32 %v1697, %v1889
        %v2018 = vsub.f32 %v1698, %v1890
        %v2019 = vsub.f32 %v1699, %v1891
        %v2020 = vsub.f32 %v1700, %v1892
        %v2021 = vsub.f32 %v1717, %v1893
        %v2022 = vsub.f32 %v1718, %v1894
        %v2023 = vsub.f32 %v1719, %v1895
        %v2024 = vsub.f32 %v1720, %v1896
        %v2025 = vsub.f32 %v1721, %v1897
        %v2026 = vsub.f32 %v1722, %v1898
        %v2027 = vsub.f32 %v1723, %v1899
        %v2028 = vsub.f32 %v1724, %v1900
        %v2029 = vsub.f32 %v1725, %v1901
        %v2030 = vsub.f32 %v1726, %v1902
        %v2031 = vsub.f32 %v1727, %v1903
        %v2032 = vsub.f32 %v1728, %v1904
        %v2033 = vsub.f32 %v1729, %v1905
        %v2034 = vsub.f32 %v1730, %v1906
        %v2035 = vsub.f32 %v1731, %v1907
        %v2036 = vsub.f32 %v1732, %v1908
        %v2037 = vsub.f32 %v1749, %v1909
        %v2038 = vsub.f32 %v1750, %v1910
        %v2039 = vsub.f32 %v1751, %v1911
        %v2040 = vsub.f32 %v1752, %v1912
        %v2041 = vsub.f32 %v1753, %v1913
        %v2042 = vsub.f32 %v1754, %v1914
        %v2043 = vsub.f32 %v1755, %v1915
        %v2044 = vsub.f32 %v1756, %v1916
        %v2045 = vsub.f32 %v1757, %v1917
        %v2046 = vsub.f32 %v1758, %v1918
        %v2047 = vsub.f32 %v1759, %v1919
        %v2048 = vsub.f32 %v1760, %v1920
        %v2049 = vsub.f32 %v1761, %v1921
        %v2050 = vsub.f32 %v1762, %v1922
        %v2051 = vsub.f32 %v1763, %v1923
        %v2052 = vsub.f32 %v1764, %v1924
        %v2053 = vsub.f32 %v1781, %v1925
        %v2054 = vsub.f32 %v1782, %v1926
        %v2055 = vsub.f32 %v1783, %v1927
        %v2056 = vsub.f32 %v1784, %v1928
        %v2057 = vsub.f32 %v1785, %v1929
        %v2058 = vsub.f32 %v1786, %v1930
        %v2059 = vsub.f32 %v1787, %v1931
        %v2060 = vsub.f32 %v1788, %v1932
        %v2061 = vsub.f32 %v1789, %v1933
        %v2062 = vsub.f32 %v1790, %v1934
        %v2063 = vsub.f32 %v1791, %v1935
        %v2064 = vsub.f32 %v1792, %v1936
        %v2065 = vsub.f32 %v1793, %v1937
        %v2066 = vsub.f32 %v1794, %v1938
        %v2067 = vsub.f32 %v1795, %v1939
        %v2068 = vsub.f32 %v1796, %v1940
        %v2069 = vsub.f32 %v1813, %v1941
        %v2070 = vsub.f32 %v1814, %v1942
        %v2071 = vsub.f32 %v1815, %v1943
        %v2072 = vsub.f32 %v1816, %v1944
        %v2073 = vsub.f32 %v1817, %v1945
        %v2074 = vsub.f32 %v1818, %v1946
        %v2075 = vsub.f32 %v1819, %v1947
        %v2076 = vsub.f32 %v1820, %v1948
        %v2077 = vsub.f32 %v1821, %v1949
        %v2078 = vsub.f32 %v1822, %v1950
        %v2079 = vsub.f32 %v1823, %v1951
        %v2080 = vsub.f32 %v1824, %v1952
        %v2081 = vsub.f32 %v1825, %v1953
        %v2082 = vsub.f32 %v1826, %v1954
        %v2083 = vsub.f32 %v1827, %v1955
        %v2084 = vsub.f32 %v1828, %v1956
        %vm2085 = vcmask 261120
        %2086 = vst.msk [vmem:[%s227] sm:$0xff] %vm2085, %v1957
        %2087 = vst.msk [vmem:[%s227 + $0x8] sm:$0xff] %vm2085, %v1958
        %2088 = vst.msk [vmem:[%s227 + $0x10] sm:$0xff] %vm2085, %v1959
        %2089 = vst.msk [vmem:[%s227 + $0x18] sm:$0xff] %vm2085, %v1960
        %2090 = vst.msk [vmem:[%s227 + $0x20] sm:$0xff] %vm2085, %v1961
        %2091 = vst.msk [vmem:[%s227 + $0x28] sm:$0xff] %vm2085, %v1962
        %2092 = vst.msk [vmem:[%s227 + $0x30] sm:$0xff] %vm2085, %v1963
        %2093 = vst.msk [vmem:[%s227 + $0x38] sm:$0xff] %vm2085, %v1964
        %2094 = vst.msk [vmem:[%s227 + $0x40] sm:$0xff] %vm2085, %v1965
        %2095 = vst.msk [vmem:[%s227 + $0x48] sm:$0xff] %vm2085, %v1966
        %2096 = vst.msk [vmem:[%s227 + $0x50] sm:$0xff] %vm2085, %v1967
        %2097 = vst.msk [vmem:[%s227 + $0x58] sm:$0xff] %vm2085, %v1968
        %2098 = vst.msk [vmem:[%s227 + $0x60] sm:$0xff] %vm2085, %v1969
        %2099 = vst.msk [vmem:[%s227 + $0x68] sm:$0xff] %vm2085, %v1970
        %2100 = vst.msk [vmem:[%s227 + $0x70] sm:$0xff] %vm2085, %v1971
        %2101 = vst.msk [vmem:[%s227 + $0x78] sm:$0xff] %vm2085, %v1972
        %2102 = vst.msk [vmem:[%s227 + $0x80] sm:$0xff] %vm2085, %v1973
        %2103 = vst.msk [vmem:[%s227 + $0x88] sm:$0xff] %vm2085, %v1974
        %2104 = vst.msk [vmem:[%s227 + $0x90] sm:$0xff] %vm2085, %v1975
        %2105 = vst.msk [vmem:[%s227 + $0x98] sm:$0xff] %vm2085, %v1976
        %2106 = vst.msk [vmem:[%s227 + $0xa0] sm:$0xff] %vm2085, %v1977
        %2107 = vst.msk [vmem:[%s227 + $0xa8] sm:$0xff] %vm2085, %v1978
        %2108 = vst.msk [vmem:[%s227 + $0xb0] sm:$0xff] %vm2085, %v1979
        %2109 = vst.msk [vmem:[%s227 + $0xb8] sm:$0xff] %vm2085, %v1980
        %2110 = vst.msk [vmem:[%s227 + $0xc0] sm:$0xff] %vm2085, %v1981
        %2111 = vst.msk [vmem:[%s227 + $0xc8] sm:$0xff] %vm2085, %v1982
        %2112 = vst.msk [vmem:[%s227 + $0xd0] sm:$0xff] %vm2085, %v1983
        %2113 = vst.msk [vmem:[%s227 + $0xd8] sm:$0xff] %vm2085, %v1984
        %2114 = vst.msk [vmem:[%s227 + $0xe0] sm:$0xff] %vm2085, %v1985
        %2115 = vst.msk [vmem:[%s227 + $0xe8] sm:$0xff] %vm2085, %v1986
        %2116 = vst.msk [vmem:[%s227 + $0xf0] sm:$0xff] %vm2085, %v1987
        %2117 = vst.msk [vmem:[%s227 + $0xf8] sm:$0xff] %vm2085, %v1988
        %2118 = vst.msk [vmem:[%s227 + $0x100] sm:$0xff] %vm2085, %v1989
        %2119 = vst.msk [vmem:[%s227 + $0x108] sm:$0xff] %vm2085, %v1990
        %2120 = vst.msk [vmem:[%s227 + $0x110] sm:$0xff] %vm2085, %v1991
        %2121 = vst.msk [vmem:[%s227 + $0x118] sm:$0xff] %vm2085, %v1992
        %2122 = vst.msk [vmem:[%s227 + $0x120] sm:$0xff] %vm2085, %v1993
        %2123 = vst.msk [vmem:[%s227 + $0x128] sm:$0xff] %vm2085, %v1994
        %2124 = vst.msk [vmem:[%s227 + $0x130] sm:$0xff] %vm2085, %v1995
        %2125 = vst.msk [vmem:[%s227 + $0x138] sm:$0xff] %vm2085, %v1996
        %2126 = vst.msk [vmem:[%s227 + $0x140] sm:$0xff] %vm2085, %v1997
        %2127 = vst.msk [vmem:[%s227 + $0x148] sm:$0xff] %vm2085, %v1998
        %2128 = vst.msk [vmem:[%s227 + $0x150] sm:$0xff] %vm2085, %v1999
        %2129 = vst.msk [vmem:[%s227 + $0x158] sm:$0xff] %vm2085, %v2000
        %2130 = vst.msk [vmem:[%s227 + $0x160] sm:$0xff] %vm2085, %v2001
        %2131 = vst.msk [vmem:[%s227 + $0x168] sm:$0xff] %vm2085, %v2002
        %2132 = vst.msk [vmem:[%s227 + $0x170] sm:$0xff] %vm2085, %v2003
        %2133 = vst.msk [vmem:[%s227 + $0x178] sm:$0xff] %vm2085, %v2004
        %2134 = vst.msk [vmem:[%s227 + $0x180] sm:$0xff] %vm2085, %v2005
        %2135 = vst.msk [vmem:[%s227 + $0x188] sm:$0xff] %vm2085, %v2006
        %2136 = vst.msk [vmem:[%s227 + $0x190] sm:$0xff] %vm2085, %v2007
        %2137 = vst.msk [vmem:[%s227 + $0x198] sm:$0xff] %vm2085, %v2008
        %2138 = vst.msk [vmem:[%s227 + $0x1a0] sm:$0xff] %vm2085, %v2009
        %2139 = vst.msk [vmem:[%s227 + $0x1a8] sm:$0xff] %vm2085, %v2010
        %2140 = vst.msk [vmem:[%s227 + $0x1b0] sm:$0xff] %vm2085, %v2011
        %2141 = vst.msk [vmem:[%s227 + $0x1b8] sm:$0xff] %vm2085, %v2012
        %2142 = vst.msk [vmem:[%s227 + $0x1c0] sm:$0xff] %vm2085, %v2013
        %2143 = vst.msk [vmem:[%s227 + $0x1c8] sm:$0xff] %vm2085, %v2014
        %2144 = vst.msk [vmem:[%s227 + $0x1d0] sm:$0xff] %vm2085, %v2015
        %2145 = vst.msk [vmem:[%s227 + $0x1d8] sm:$0xff] %vm2085, %v2016
        %2146 = vst.msk [vmem:[%s227 + $0x1e0] sm:$0xff] %vm2085, %v2017
        %2147 = vst.msk [vmem:[%s227 + $0x1e8] sm:$0xff] %vm2085, %v2018
        %2148 = vst.msk [vmem:[%s227 + $0x1f0] sm:$0xff] %vm2085, %v2019
        %2149 = vst.msk [vmem:[%s227 + $0x1f8] sm:$0xff] %vm2085, %v2020
        %2150 = vst.msk [vmem:[%s227 + $0x200] sm:$0xff] %vm2085, %v2021
        %2151 = vst.msk [vmem:[%s227 + $0x208] sm:$0xff] %vm2085, %v2022
        %2152 = vst.msk [vmem:[%s227 + $0x210] sm:$0xff] %vm2085, %v2023
        %2153 = vst.msk [vmem:[%s227 + $0x218] sm:$0xff] %vm2085, %v2024
        %2154 = vst.msk [vmem:[%s227 + $0x220] sm:$0xff] %vm2085, %v2025
        %2155 = vst.msk [vmem:[%s227 + $0x228] sm:$0xff] %vm2085, %v2026
        %2156 = vst.msk [vmem:[%s227 + $0x230] sm:$0xff] %vm2085, %v2027
        %2157 = vst.msk [vmem:[%s227 + $0x238] sm:$0xff] %vm2085, %v2028
        %2158 = vst.msk [vmem:[%s227 + $0x240] sm:$0xff] %vm2085, %v2029
        %2159 = vst.msk [vmem:[%s227 + $0x248] sm:$0xff] %vm2085, %v2030
        %2160 = vst.msk [vmem:[%s227 + $0x250] sm:$0xff] %vm2085, %v2031
        %2161 = vst.msk [vmem:[%s227 + $0x258] sm:$0xff] %vm2085, %v2032
        %2162 = vst.msk [vmem:[%s227 + $0x260] sm:$0xff] %vm2085, %v2033
        %2163 = vst.msk [vmem:[%s227 + $0x268] sm:$0xff] %vm2085, %v2034
        %2164 = vst.msk [vmem:[%s227 + $0x270] sm:$0xff] %vm2085, %v2035
        %2165 = vst.msk [vmem:[%s227 + $0x278] sm:$0xff] %vm2085, %v2036
        %2166 = vst.msk [vmem:[%s227 + $0x280] sm:$0xff] %vm2085, %v2037
        %2167 = vst.msk [vmem:[%s227 + $0x288] sm:$0xff] %vm2085, %v2038
        %2168 = vst.msk [vmem:[%s227 + $0x290] sm:$0xff] %vm2085, %v2039
        %2169 = vst.msk [vmem:[%s227 + $0x298] sm:$0xff] %vm2085, %v2040
        %2170 = vst.msk [vmem:[%s227 + $0x2a0] sm:$0xff] %vm2085, %v2041
        %2171 = vst.msk [vmem:[%s227 + $0x2a8] sm:$0xff] %vm2085, %v2042
        %2172 = vst.msk [vmem:[%s227 + $0x2b0] sm:$0xff] %vm2085, %v2043
        %2173 = vst.msk [vmem:[%s227 + $0x2b8] sm:$0xff] %vm2085, %v2044
        %2174 = vst.msk [vmem:[%s227 + $0x2c0] sm:$0xff] %vm2085, %v2045
        %2175 = vst.msk [vmem:[%s227 + $0x2c8] sm:$0xff] %vm2085, %v2046
        %2176 = vst.msk [vmem:[%s227 + $0x2d0] sm:$0xff] %vm2085, %v2047
        %2177 = vst.msk [vmem:[%s227 + $0x2d8] sm:$0xff] %vm2085, %v2048
        %2178 = vst.msk [vmem:[%s227 + $0x2e0] sm:$0xff] %vm2085, %v2049
        %2179 = vst.msk [vmem:[%s227 + $0x2e8] sm:$0xff] %vm2085, %v2050
        %2180 = vst.msk [vmem:[%s227 + $0x2f0] sm:$0xff] %vm2085, %v2051
        %2181 = vst.msk [vmem:[%s227 + $0x2f8] sm:$0xff] %vm2085, %v2052
        %2182 = vst.msk [vmem:[%s227 + $0x300] sm:$0xff] %vm2085, %v2053
        %2183 = vst.msk [vmem:[%s227 + $0x308] sm:$0xff] %vm2085, %v2054
        %2184 = vst.msk [vmem:[%s227 + $0x310] sm:$0xff] %vm2085, %v2055
        %2185 = vst.msk [vmem:[%s227 + $0x318] sm:$0xff] %vm2085, %v2056
        %2186 = vst.msk [vmem:[%s227 + $0x320] sm:$0xff] %vm2085, %v2057
        %2187 = vst.msk [vmem:[%s227 + $0x328] sm:$0xff] %vm2085, %v2058
        %2188 = vst.msk [vmem:[%s227 + $0x330] sm:$0xff] %vm2085, %v2059
        %2189 = vst.msk [vmem:[%s227 + $0x338] sm:$0xff] %vm2085, %v2060
        %2190 = vst.msk [vmem:[%s227 + $0x340] sm:$0xff] %vm2085, %v2061
        %2191 = vst.msk [vmem:[%s227 + $0x348] sm:$0xff] %vm2085, %v2062
        %2192 = vst.msk [vmem:[%s227 + $0x350] sm:$0xff] %vm2085, %v2063
        %2193 = vst.msk [vmem:[%s227 + $0x358] sm:$0xff] %vm2085, %v2064
        %2194 = vst.msk [vmem:[%s227 + $0x360] sm:$0xff] %vm2085, %v2065
        %2195 = vst.msk [vmem:[%s227 + $0x368] sm:$0xff] %vm2085, %v2066
        %2196 = vst.msk [vmem:[%s227 + $0x370] sm:$0xff] %vm2085, %v2067
        %2197 = vst.msk [vmem:[%s227 + $0x378] sm:$0xff] %vm2085, %v2068
        %2198 = vst.msk [vmem:[%s227 + $0x380] sm:$0xff] %vm2085, %v2069
        %2199 = vst.msk [vmem:[%s227 + $0x388] sm:$0xff] %vm2085, %v2070
        %2200 = vst.msk [vmem:[%s227 + $0x390] sm:$0xff] %vm2085, %v2071
        %2201 = vst.msk [vmem:[%s227 + $0x398] sm:$0xff] %vm2085, %v2072
        %2202 = vst.msk [vmem:[%s227 + $0x3a0] sm:$0xff] %vm2085, %v2073
        %2203 = vst.msk [vmem:[%s227 + $0x3a8] sm:$0xff] %vm2085, %v2074
        %2204 = vst.msk [vmem:[%s227 + $0x3b0] sm:$0xff] %vm2085, %v2075
        %2205 = vst.msk [vmem:[%s227 + $0x3b8] sm:$0xff] %vm2085, %v2076
        %2206 = vst.msk [vmem:[%s227 + $0x3c0] sm:$0xff] %vm2085, %v2077
        %2207 = vst.msk [vmem:[%s227 + $0x3c8] sm:$0xff] %vm2085, %v2078
        %2208 = vst.msk [vmem:[%s227 + $0x3d0] sm:$0xff] %vm2085, %v2079
        %2209 = vst.msk [vmem:[%s227 + $0x3d8] sm:$0xff] %vm2085, %v2080
        %2210 = vst.msk [vmem:[%s227 + $0x3e0] sm:$0xff] %vm2085, %v2081
        %2211 = vst.msk [vmem:[%s227 + $0x3e8] sm:$0xff] %vm2085, %v2082
        %2212 = vst.msk [vmem:[%s227 + $0x3f0] sm:$0xff] %vm2085, %v2083
        %2213 = vst.msk [vmem:[%s227 + $0x3f8] sm:$0xff] %vm2085, %v2084
        %s2214 = sand.u32 %s117, 1
        %s2215 = sand.u32 %s117, 1
        %s2216 = smul.addr %s2215, 1024
        %s2217 = scalar_lea.vmem [#allocation2], %s2216
        // Predicated region
        $region37: #{tpu_custom_call.1} parent=35 // pred_check
          %p2218 = pneg %p127
        $region38: #{tpu_custom_call.1} parent=35 // pred_check_branch
          %2220 = sbr.rel (%p2218) target = $region40
        $region39: #{tpu_custom_call.1} parent=35 // pred_region
          %s2221 = smul.u32 128, %s15
          %s2222 = ssub.s32 375, %s2221
          %p2223 = scmp.lt.s32.totalorder %s2222, 128
          %s2224 = scalar_select %p2223, %s2222, 128
          %s2225 = smul.u32 128, %s2224
          %p2226 = scmp.ne.s32.totalorder 0, %s2225
          %s2227 = smul.addr %s2221, 8
          %s2228 = scalar_lea.vmem %s4, %s2227
          // Predicated region
          $region41: #{tpu_custom_call.1} parent=39 // pred_check
            %p2229 = pneg %p2226
          $region42: #{tpu_custom_call.1} parent=39 // pred_check_branch
            %2231 = sbr.rel (%p2229) target = $region44
          $region43: #{tpu_custom_call.1} parent=39 // pred_region
            // Predicated region
            $region45: #{tpu_custom_call.1} parent=43 // pred_check
              _
            $region46: #{tpu_custom_call.1} parent=43 // pred_check_branch
              %2233 = sbr.rel (0) target = $region48
            $region47: #{tpu_custom_call.1} parent=43 // pred_region
              // Predicated region
              $region67: #{tpu_custom_call.1} parent=47 // pred_check
                _
              $region68: #{tpu_custom_call.1} parent=47 // pred_check_branch
                %2408 = sbr.rel (0) target = $region70
              $region69: #{tpu_custom_call.1} parent=47 // pred_region
                %s2409 = sshrl.u32 %s2224, 6
                // While loop
                $region71: #{tpu_custom_call.1} parent=69 // loop_pre_header
                  _
                $region72: #{tpu_custom_call.1} parent=69 // loop_header
                  %s2411 = sphi 0, %s2413
                  %p2412 = scmp.ge.s32.totalorder %s2411, %s2409
                  %s2416 = sphi 0, %s2549
                  %s2417 = sphi %s2217, %s2552
                  %s2418 = sphi %s2228, %s2553
                $region73: #{tpu_custom_call.1} parent=69 // loop_header_branch
                  %2415 = sbr.rel (%p2412) target = $region77
                $region74: #{tpu_custom_call.1} parent=69 // loop_body
                  %v2419 = vld [vmem:[%s2417] sm:$0xff]
                  %2420 = vst [vmem:[%s2418] sm:$0xff] %v2419
                  %v2421 = vld [vmem:[%s2417 + $0x8] sm:$0xff]
                  %2422 = vst [vmem:[%s2418 + $0x8] sm:$0xff] %v2421
                  %v2423 = vld [vmem:[%s2417 + $0x10] sm:$0xff]
                  %2424 = vst [vmem:[%s2418 + $0x10] sm:$0xff] %v2423
                  %v2425 = vld [vmem:[%s2417 + $0x18] sm:$0xff]
                  %2426 = vst [vmem:[%s2418 + $0x18] sm:$0xff] %v2425
                  %v2427 = vld [vmem:[%s2417 + $0x20] sm:$0xff]
                  %2428 = vst [vmem:[%s2418 + $0x20] sm:$0xff] %v2427
                  %v2429 = vld [vmem:[%s2417 + $0x28] sm:$0xff]
                  %2430 = vst [vmem:[%s2418 + $0x28] sm:$0xff] %v2429
                  %v2431 = vld [vmem:[%s2417 + $0x30] sm:$0xff]
                  %2432 = vst [vmem:[%s2418 + $0x30] sm:$0xff] %v2431
                  %v2433 = vld [vmem:[%s2417 + $0x38] sm:$0xff]
                  %2434 = vst [vmem:[%s2418 + $0x38] sm:$0xff] %v2433
                  %v2435 = vld [vmem:[%s2417 + $0x40] sm:$0xff]
                  %2436 = vst [vmem:[%s2418 + $0x40] sm:$0xff] %v2435
                  %v2437 = vld [vmem:[%s2417 + $0x48] sm:$0xff]
                  %2438 = vst [vmem:[%s2418 + $0x48] sm:$0xff] %v2437
                  %v2439 = vld [vmem:[%s2417 + $0x50] sm:$0xff]
                  %2440 = vst [vmem:[%s2418 + $0x50] sm:$0xff] %v2439
                  %v2441 = vld [vmem:[%s2417 + $0x58] sm:$0xff]
                  %2442 = vst [vmem:[%s2418 + $0x58] sm:$0xff] %v2441
                  %v2443 = vld [vmem:[%s2417 + $0x60] sm:$0xff]
                  %2444 = vst [vmem:[%s2418 + $0x60] sm:$0xff] %v2443
                  %v2445 = vld [vmem:[%s2417 + $0x68] sm:$0xff]
                  %2446 = vst [vmem:[%s2418 + $0x68] sm:$0xff] %v2445
                  %v2447 = vld [vmem:[%s2417 + $0x70] sm:$0xff]
                  %2448 = vst [vmem:[%s2418 + $0x70] sm:$0xff] %v2447
                  %v2449 = vld [vmem:[%s2417 + $0x78] sm:$0xff]
                  %2450 = vst [vmem:[%s2418 + $0x78] sm:$0xff] %v2449
                  %v2451 = vld [vmem:[%s2417 + $0x80] sm:$0xff]
                  %2452 = vst [vmem:[%s2418 + $0x80] sm:$0xff] %v2451
                  %v2453 = vld [vmem:[%s2417 + $0x88] sm:$0xff]
                  %2454 = vst [vmem:[%s2418 + $0x88] sm:$0xff] %v2453
                  %v2455 = vld [vmem:[%s2417 + $0x90] sm:$0xff]
                  %2456 = vst [vmem:[%s2418 + $0x90] sm:$0xff] %v2455
                  %v2457 = vld [vmem:[%s2417 + $0x98] sm:$0xff]
                  %2458 = vst [vmem:[%s2418 + $0x98] sm:$0xff] %v2457
                  %v2459 = vld [vmem:[%s2417 + $0xa0] sm:$0xff]
                  %2460 = vst [vmem:[%s2418 + $0xa0] sm:$0xff] %v2459
                  %v2461 = vld [vmem:[%s2417 + $0xa8] sm:$0xff]
                  %2462 = vst [vmem:[%s2418 + $0xa8] sm:$0xff] %v2461
                  %v2463 = vld [vmem:[%s2417 + $0xb0] sm:$0xff]
                  %2464 = vst [vmem:[%s2418 + $0xb0] sm:$0xff] %v2463
                  %v2465 = vld [vmem:[%s2417 + $0xb8] sm:$0xff]
                  %2466 = vst [vmem:[%s2418 + $0xb8] sm:$0xff] %v2465
                  %v2467 = vld [vmem:[%s2417 + $0xc0] sm:$0xff]
                  %2468 = vst [vmem:[%s2418 + $0xc0] sm:$0xff] %v2467
                  %v2469 = vld [vmem:[%s2417 + $0xc8] sm:$0xff]
                  %2470 = vst [vmem:[%s2418 + $0xc8] sm:$0xff] %v2469
                  %v2471 = vld [vmem:[%s2417 + $0xd0] sm:$0xff]
                  %2472 = vst [vmem:[%s2418 + $0xd0] sm:$0xff] %v2471
                  %v2473 = vld [vmem:[%s2417 + $0xd8] sm:$0xff]
                  %2474 = vst [vmem:[%s2418 + $0xd8] sm:$0xff] %v2473
                  %v2475 = vld [vmem:[%s2417 + $0xe0] sm:$0xff]
                  %2476 = vst [vmem:[%s2418 + $0xe0] sm:$0xff] %v2475
                  %v2477 = vld [vmem:[%s2417 + $0xe8] sm:$0xff]
                  %2478 = vst [vmem:[%s2418 + $0xe8] sm:$0xff] %v2477
                  %v2479 = vld [vmem:[%s2417 + $0xf0] sm:$0xff]
                  %2480 = vst [vmem:[%s2418 + $0xf0] sm:$0xff] %v2479
                  %v2481 = vld [vmem:[%s2417 + $0xf8] sm:$0xff]
                  %2482 = vst [vmem:[%s2418 + $0xf8] sm:$0xff] %v2481
                  %v2483 = vld [vmem:[%s2417 + $0x100] sm:$0xff]
                  %2484 = vst [vmem:[%s2418 + $0x100] sm:$0xff] %v2483
                  %v2485 = vld [vmem:[%s2417 + $0x108] sm:$0xff]
                  %2486 = vst [vmem:[%s2418 + $0x108] sm:$0xff] %v2485
                  %v2487 = vld [vmem:[%s2417 + $0x110] sm:$0xff]
                  %2488 = vst [vmem:[%s2418 + $0x110] sm:$0xff] %v2487
                  %v2489 = vld [vmem:[%s2417 + $0x118] sm:$0xff]
                  %2490 = vst [vmem:[%s2418 + $0x118] sm:$0xff] %v2489
                  %v2491 = vld [vmem:[%s2417 + $0x120] sm:$0xff]
                  %2492 = vst [vmem:[%s2418 + $0x120] sm:$0xff] %v2491
                  %v2493 = vld [vmem:[%s2417 + $0x128] sm:$0xff]
                  %2494 = vst [vmem:[%s2418 + $0x128] sm:$0xff] %v2493
                  %v2495 = vld [vmem:[%s2417 + $0x130] sm:$0xff]
                  %2496 = vst [vmem:[%s2418 + $0x130] sm:$0xff] %v2495
                  %v2497 = vld [vmem:[%s2417 + $0x138] sm:$0xff]
                  %2498 = vst [vmem:[%s2418 + $0x138] sm:$0xff] %v2497
                  %v2499 = vld [vmem:[%s2417 + $0x140] sm:$0xff]
                  %2500 = vst [vmem:[%s2418 + $0x140] sm:$0xff] %v2499
                  %v2501 = vld [vmem:[%s2417 + $0x148] sm:$0xff]
                  %2502 = vst [vmem:[%s2418 + $0x148] sm:$0xff] %v2501
                  %v2503 = vld [vmem:[%s2417 + $0x150] sm:$0xff]
                  %2504 = vst [vmem:[%s2418 + $0x150] sm:$0xff] %v2503
                  %v2505 = vld [vmem:[%s2417 + $0x158] sm:$0xff]
                  %2506 = vst [vmem:[%s2418 + $0x158] sm:$0xff] %v2505
                  %v2507 = vld [vmem:[%s2417 + $0x160] sm:$0xff]
                  %2508 = vst [vmem:[%s2418 + $0x160] sm:$0xff] %v2507
                  %v2509 = vld [vmem:[%s2417 + $0x168] sm:$0xff]
                  %2510 = vst [vmem:[%s2418 + $0x168] sm:$0xff] %v2509
                  %v2511 = vld [vmem:[%s2417 + $0x170] sm:$0xff]
                  %2512 = vst [vmem:[%s2418 + $0x170] sm:$0xff] %v2511
                  %v2513 = vld [vmem:[%s2417 + $0x178] sm:$0xff]
                  %2514 = vst [vmem:[%s2418 + $0x178] sm:$0xff] %v2513
                  %v2515 = vld [vmem:[%s2417 + $0x180] sm:$0xff]
                  %2516 = vst [vmem:[%s2418 + $0x180] sm:$0xff] %v2515
                  %v2517 = vld [vmem:[%s2417 + $0x188] sm:$0xff]
                  %2518 = vst [vmem:[%s2418 + $0x188] sm:$0xff] %v2517
                  %v2519 = vld [vmem:[%s2417 + $0x190] sm:$0xff]
                  %2520 = vst [vmem:[%s2418 + $0x190] sm:$0xff] %v2519
                  %v2521 = vld [vmem:[%s2417 + $0x198] sm:$0xff]
                  %2522 = vst [vmem:[%s2418 + $0x198] sm:$0xff] %v2521
                  %v2523 = vld [vmem:[%s2417 + $0x1a0] sm:$0xff]
                  %2524 = vst [vmem:[%s2418 + $0x1a0] sm:$0xff] %v2523
                  %v2525 = vld [vmem:[%s2417 + $0x1a8] sm:$0xff]
                  %2526 = vst [vmem:[%s2418 + $0x1a8] sm:$0xff] %v2525
                  %v2527 = vld [vmem:[%s2417 + $0x1b0] sm:$0xff]
                  %2528 = vst [vmem:[%s2418 + $0x1b0] sm:$0xff] %v2527
                  %v2529 = vld [vmem:[%s2417 + $0x1b8] sm:$0xff]
                  %2530 = vst [vmem:[%s2418 + $0x1b8] sm:$0xff] %v2529
                  %v2531 = vld [vmem:[%s2417 + $0x1c0] sm:$0xff]
                  %2532 = vst [vmem:[%s2418 + $0x1c0] sm:$0xff] %v2531
                  %v2533 = vld [vmem:[%s2417 + $0x1c8] sm:$0xff]
                  %2534 = vst [vmem:[%s2418 + $0x1c8] sm:$0xff] %v2533
                  %v2535 = vld [vmem:[%s2417 + $0x1d0] sm:$0xff]
                  %2536 = vst [vmem:[%s2418 + $0x1d0] sm:$0xff] %v2535
                  %v2537 = vld [vmem:[%s2417 + $0x1d8] sm:$0xff]
                  %2538 = vst [vmem:[%s2418 + $0x1d8] sm:$0xff] %v2537
                  %v2539 = vld [vmem:[%s2417 + $0x1e0] sm:$0xff]
                  %2540 = vst [vmem:[%s2418 + $0x1e0] sm:$0xff] %v2539
                  %v2541 = vld [vmem:[%s2417 + $0x1e8] sm:$0xff]
                  %2542 = vst [vmem:[%s2418 + $0x1e8] sm:$0xff] %v2541
                  %v2543 = vld [vmem:[%s2417 + $0x1f0] sm:$0xff]
                  %2544 = vst [vmem:[%s2418 + $0x1f0] sm:$0xff] %v2543
                  %v2545 = vld [vmem:[%s2417 + $0x1f8] sm:$0xff]
                  %2546 = vst [vmem:[%s2418 + $0x1f8] sm:$0xff] %v2545
                  %s2547 = sadd.s32 1, %s2416
                  %p2548 = scmp.ge.s32.totalorder %s2547, %s2409
                  %s2549 = scalar_select %p2548, 0, %s2547
                  %s2550 = smul.u32 %s2549, 512
                  %s2551 = smul.u32 %s2549, 512
                  %s2552 = scalar_lea.vmem %s2217, %s2550 [#allocation2]
                  %s2553 = scalar_lea.vmem %s2228, %s2551
                $region75: #{tpu_custom_call.1} parent=69 // loop_footer
                  %s2413 = sadd.s32 %s2411, 1
                $region76: #{tpu_custom_call.1} parent=69 // loop_footer_branch
                  %2410 = sbr.rel target = $region72
                $region77: #{tpu_custom_call.1} parent=69 // loop_exit
                  _
                %s2554 = sshrl.u32 %s2224, 6
                %s2555 = sand.u32 %s2224, 63
                %s2556 = smul.u32 %s2554, 64
                %s2557 = smul.u32 8, %s2556
                %s2558 = scalar_lea.vmem %s2217, %s2557 [#allocation2]
                %s2559 = smul.u32 8, %s2556
                %s2560 = scalar_lea.vmem %s2228, %s2559
                // While loop
                $region78: #{tpu_custom_call.1} parent=69 // loop_pre_header
                  _
                $region79: #{tpu_custom_call.1} parent=69 // loop_header
                  %s2562 = sphi 0, %s2564
                  %p2563 = scmp.ge.s32.totalorder %s2562, %s2555
                  %s2567 = sphi 0, %s2574
                  %s2568 = sphi %s2558, %s2577
                  %s2569 = sphi %s2560, %s2578
                $region80: #{tpu_custom_call.1} parent=69 // loop_header_branch
                  %2566 = sbr.rel (%p2563) target = $region84
                $region81: #{tpu_custom_call.1} parent=69 // loop_body
                  %v2570 = vld [vmem:[%s2568] sm:$0xff]
                  %2571 = vst [vmem:[%s2569] sm:$0xff] %v2570
                  %s2572 = sadd.s32 1, %s2567
                  %p2573 = scmp.ge.s32.totalorder %s2572, %s2555
                  %s2574 = scalar_select %p2573, 0, %s2572
                  %s2575 = smul.u32 %s2574, 8
                  %s2576 = smul.u32 %s2574, 8
                  %s2577 = scalar_lea.vmem %s2558, %s2575 [#allocation2]
                  %s2578 = scalar_lea.vmem %s2560, %s2576
                $region82: #{tpu_custom_call.1} parent=69 // loop_footer
                  %s2564 = sadd.s32 %s2562, 1
                $region83: #{tpu_custom_call.1} parent=69 // loop_footer_branch
                  %2561 = sbr.rel target = $region79
                $region84: #{tpu_custom_call.1} parent=69 // loop_exit
                  _
              $region70: #{tpu_custom_call.1} parent=47 // pred_fallthru
                _
              // Predicated region
              $region85: #{tpu_custom_call.1} parent=47 // pred_check
                _
              $region86: #{tpu_custom_call.1} parent=47 // pred_check_branch
                %2580 = sbr.rel target = $region88
              $region87: #{tpu_custom_call.1} parent=47 // pred_region
                _
              $region88: #{tpu_custom_call.1} parent=47 // pred_fallthru
                _
            $region48: #{tpu_custom_call.1} parent=43 // pred_fallthru
              _
            // Predicated region
            $region49: #{tpu_custom_call.1} parent=43 // pred_check
              _
            $region50: #{tpu_custom_call.1} parent=43 // pred_check_branch
              %2235 = sbr.rel target = $region52
            $region51: #{tpu_custom_call.1} parent=43 // pred_region
              %s2237 = sshrl.u32 %s2224, 6
              // While loop
              $region53: #{tpu_custom_call.1} parent=51 // loop_pre_header
                _
              $region54: #{tpu_custom_call.1} parent=51 // loop_header
                %s2239 = sphi 0, %s2241
                %p2240 = scmp.ge.s32.totalorder %s2239, %s2237
                %s2244 = sphi 0, %s2377
                %s2245 = sphi %s2217, %s2380
                %s2246 = sphi %s2228, %s2381
              $region55: #{tpu_custom_call.1} parent=51 // loop_header_branch
                %2243 = sbr.rel (%p2240) target = $region59
              $region56: #{tpu_custom_call.1} parent=51 // loop_body
                %v2247 = vld [vmem:[%s2245] sm:$0xff]
                %2248 = vst [vmem:[%s2246] sm:$0xff] %v2247
                %v2249 = vld [vmem:[%s2245 + $0x8] sm:$0xff]
                %2250 = vst [vmem:[%s2246 + $0x8] sm:$0xff] %v2249
                %v2251 = vld [vmem:[%s2245 + $0x10] sm:$0xff]
                %2252 = vst [vmem:[%s2246 + $0x10] sm:$0xff] %v2251
                %v2253 = vld [vmem:[%s2245 + $0x18] sm:$0xff]
                %2254 = vst [vmem:[%s2246 + $0x18] sm:$0xff] %v2253
                %v2255 = vld [vmem:[%s2245 + $0x20] sm:$0xff]
                %2256 = vst [vmem:[%s2246 + $0x20] sm:$0xff] %v2255
                %v2257 = vld [vmem:[%s2245 + $0x28] sm:$0xff]
                %2258 = vst [vmem:[%s2246 + $0x28] sm:$0xff] %v2257
                %v2259 = vld [vmem:[%s2245 + $0x30] sm:$0xff]
                %2260 = vst [vmem:[%s2246 + $0x30] sm:$0xff] %v2259
                %v2261 = vld [vmem:[%s2245 + $0x38] sm:$0xff]
                %2262 = vst [vmem:[%s2246 + $0x38] sm:$0xff] %v2261
                %v2263 = vld [vmem:[%s2245 + $0x40] sm:$0xff]
                %2264 = vst [vmem:[%s2246 + $0x40] sm:$0xff] %v2263
                %v2265 = vld [vmem:[%s2245 + $0x48] sm:$0xff]
                %2266 = vst [vmem:[%s2246 + $0x48] sm:$0xff] %v2265
                %v2267 = vld [vmem:[%s2245 + $0x50] sm:$0xff]
                %2268 = vst [vmem:[%s2246 + $0x50] sm:$0xff] %v2267
                %v2269 = vld [vmem:[%s2245 + $0x58] sm:$0xff]
                %2270 = vst [vmem:[%s2246 + $0x58] sm:$0xff] %v2269
                %v2271 = vld [vmem:[%s2245 + $0x60] sm:$0xff]
                %2272 = vst [vmem:[%s2246 + $0x60] sm:$0xff] %v2271
                %v2273 = vld [vmem:[%s2245 + $0x68] sm:$0xff]
                %2274 = vst [vmem:[%s2246 + $0x68] sm:$0xff] %v2273
                %v2275 = vld [vmem:[%s2245 + $0x70] sm:$0xff]
                %2276 = vst [vmem:[%s2246 + $0x70] sm:$0xff] %v2275
                %v2277 = vld [vmem:[%s2245 + $0x78] sm:$0xff]
                %2278 = vst [vmem:[%s2246 + $0x78] sm:$0xff] %v2277
                %v2279 = vld [vmem:[%s2245 + $0x80] sm:$0xff]
                %2280 = vst [vmem:[%s2246 + $0x80] sm:$0xff] %v2279
                %v2281 = vld [vmem:[%s2245 + $0x88] sm:$0xff]
                %2282 = vst [vmem:[%s2246 + $0x88] sm:$0xff] %v2281
                %v2283 = vld [vmem:[%s2245 + $0x90] sm:$0xff]
                %2284 = vst [vmem:[%s2246 + $0x90] sm:$0xff] %v2283
                %v2285 = vld [vmem:[%s2245 + $0x98] sm:$0xff]
                %2286 = vst [vmem:[%s2246 + $0x98] sm:$0xff] %v2285
                %v2287 = vld [vmem:[%s2245 + $0xa0] sm:$0xff]
                %2288 = vst [vmem:[%s2246 + $0xa0] sm:$0xff] %v2287
                %v2289 = vld [vmem:[%s2245 + $0xa8] sm:$0xff]
                %2290 = vst [vmem:[%s2246 + $0xa8] sm:$0xff] %v2289
                %v2291 = vld [vmem:[%s2245 + $0xb0] sm:$0xff]
                %2292 = vst [vmem:[%s2246 + $0xb0] sm:$0xff] %v2291
                %v2293 = vld [vmem:[%s2245 + $0xb8] sm:$0xff]
                %2294 = vst [vmem:[%s2246 + $0xb8] sm:$0xff] %v2293
                %v2295 = vld [vmem:[%s2245 + $0xc0] sm:$0xff]
                %2296 = vst [vmem:[%s2246 + $0xc0] sm:$0xff] %v2295
                %v2297 = vld [vmem:[%s2245 + $0xc8] sm:$0xff]
                %2298 = vst [vmem:[%s2246 + $0xc8] sm:$0xff] %v2297
                %v2299 = vld [vmem:[%s2245 + $0xd0] sm:$0xff]
                %2300 = vst [vmem:[%s2246 + $0xd0] sm:$0xff] %v2299
                %v2301 = vld [vmem:[%s2245 + $0xd8] sm:$0xff]
                %2302 = vst [vmem:[%s2246 + $0xd8] sm:$0xff] %v2301
                %v2303 = vld [vmem:[%s2245 + $0xe0] sm:$0xff]
                %2304 = vst [vmem:[%s2246 + $0xe0] sm:$0xff] %v2303
                %v2305 = vld [vmem:[%s2245 + $0xe8] sm:$0xff]
                %2306 = vst [vmem:[%s2246 + $0xe8] sm:$0xff] %v2305
                %v2307 = vld [vmem:[%s2245 + $0xf0] sm:$0xff]
                %2308 = vst [vmem:[%s2246 + $0xf0] sm:$0xff] %v2307
                %v2309 = vld [vmem:[%s2245 + $0xf8] sm:$0xff]
                %2310 = vst [vmem:[%s2246 + $0xf8] sm:$0xff] %v2309
                %v2311 = vld [vmem:[%s2245 + $0x100] sm:$0xff]
                %2312 = vst [vmem:[%s2246 + $0x100] sm:$0xff] %v2311
                %v2313 = vld [vmem:[%s2245 + $0x108] sm:$0xff]
                %2314 = vst [vmem:[%s2246 + $0x108] sm:$0xff] %v2313
                %v2315 = vld [vmem:[%s2245 + $0x110] sm:$0xff]
                %2316 = vst [vmem:[%s2246 + $0x110] sm:$0xff] %v2315
                %v2317 = vld [vmem:[%s2245 + $0x118] sm:$0xff]
                %2318 = vst [vmem:[%s2246 + $0x118] sm:$0xff] %v2317
                %v2319 = vld [vmem:[%s2245 + $0x120] sm:$0xff]
                %2320 = vst [vmem:[%s2246 + $0x120] sm:$0xff] %v2319
                %v2321 = vld [vmem:[%s2245 + $0x128] sm:$0xff]
                %2322 = vst [vmem:[%s2246 + $0x128] sm:$0xff] %v2321
                %v2323 = vld [vmem:[%s2245 + $0x130] sm:$0xff]
                %2324 = vst [vmem:[%s2246 + $0x130] sm:$0xff] %v2323
                %v2325 = vld [vmem:[%s2245 + $0x138] sm:$0xff]
                %2326 = vst [vmem:[%s2246 + $0x138] sm:$0xff] %v2325
                %v2327 = vld [vmem:[%s2245 + $0x140] sm:$0xff]
                %2328 = vst [vmem:[%s2246 + $0x140] sm:$0xff] %v2327
                %v2329 = vld [vmem:[%s2245 + $0x148] sm:$0xff]
                %2330 = vst [vmem:[%s2246 + $0x148] sm:$0xff] %v2329
                %v2331 = vld [vmem:[%s2245 + $0x150] sm:$0xff]
                %2332 = vst [vmem:[%s2246 + $0x150] sm:$0xff] %v2331
                %v2333 = vld [vmem:[%s2245 + $0x158] sm:$0xff]
                %2334 = vst [vmem:[%s2246 + $0x158] sm:$0xff] %v2333
                %v2335 = vld [vmem:[%s2245 + $0x160] sm:$0xff]
                %2336 = vst [vmem:[%s2246 + $0x160] sm:$0xff] %v2335
                %v2337 = vld [vmem:[%s2245 + $0x168] sm:$0xff]
                %2338 = vst [vmem:[%s2246 + $0x168] sm:$0xff] %v2337
                %v2339 = vld [vmem:[%s2245 + $0x170] sm:$0xff]
                %2340 = vst [vmem:[%s2246 + $0x170] sm:$0xff] %v2339
                %v2341 = vld [vmem:[%s2245 + $0x178] sm:$0xff]
                %2342 = vst [vmem:[%s2246 + $0x178] sm:$0xff] %v2341
                %v2343 = vld [vmem:[%s2245 + $0x180] sm:$0xff]
                %2344 = vst [vmem:[%s2246 + $0x180] sm:$0xff] %v2343
                %v2345 = vld [vmem:[%s2245 + $0x188] sm:$0xff]
                %2346 = vst [vmem:[%s2246 + $0x188] sm:$0xff] %v2345
                %v2347 = vld [vmem:[%s2245 + $0x190] sm:$0xff]
                %2348 = vst [vmem:[%s2246 + $0x190] sm:$0xff] %v2347
                %v2349 = vld [vmem:[%s2245 + $0x198] sm:$0xff]
                %2350 = vst [vmem:[%s2246 + $0x198] sm:$0xff] %v2349
                %v2351 = vld [vmem:[%s2245 + $0x1a0] sm:$0xff]
                %2352 = vst [vmem:[%s2246 + $0x1a0] sm:$0xff] %v2351
                %v2353 = vld [vmem:[%s2245 + $0x1a8] sm:$0xff]
                %2354 = vst [vmem:[%s2246 + $0x1a8] sm:$0xff] %v2353
                %v2355 = vld [vmem:[%s2245 + $0x1b0] sm:$0xff]
                %2356 = vst [vmem:[%s2246 + $0x1b0] sm:$0xff] %v2355
                %v2357 = vld [vmem:[%s2245 + $0x1b8] sm:$0xff]
                %2358 = vst [vmem:[%s2246 + $0x1b8] sm:$0xff] %v2357
                %v2359 = vld [vmem:[%s2245 + $0x1c0] sm:$0xff]
                %2360 = vst [vmem:[%s2246 + $0x1c0] sm:$0xff] %v2359
                %v2361 = vld [vmem:[%s2245 + $0x1c8] sm:$0xff]
                %2362 = vst [vmem:[%s2246 + $0x1c8] sm:$0xff] %v2361
                %v2363 = vld [vmem:[%s2245 + $0x1d0] sm:$0xff]
                %2364 = vst [vmem:[%s2246 + $0x1d0] sm:$0xff] %v2363
                %v2365 = vld [vmem:[%s2245 + $0x1d8] sm:$0xff]
                %2366 = vst [vmem:[%s2246 + $0x1d8] sm:$0xff] %v2365
                %v2367 = vld [vmem:[%s2245 + $0x1e0] sm:$0xff]
                %2368 = vst [vmem:[%s2246 + $0x1e0] sm:$0xff] %v2367
                %v2369 = vld [vmem:[%s2245 + $0x1e8] sm:$0xff]
                %2370 = vst [vmem:[%s2246 + $0x1e8] sm:$0xff] %v2369
                %v2371 = vld [vmem:[%s2245 + $0x1f0] sm:$0xff]
                %2372 = vst [vmem:[%s2246 + $0x1f0] sm:$0xff] %v2371
                %v2373 = vld [vmem:[%s2245 + $0x1f8] sm:$0xff]
                %2374 = vst [vmem:[%s2246 + $0x1f8] sm:$0xff] %v2373
                %s2375 = sadd.s32 1, %s2244
                %p2376 = scmp.ge.s32.totalorder %s2375, %s2237
                %s2377 = scalar_select %p2376, 0, %s2375
                %s2378 = smul.u32 %s2377, 512
                %s2379 = smul.u32 %s2377, 512
                %s2380 = scalar_lea.vmem %s2217, %s2378 [#allocation2]
                %s2381 = scalar_lea.vmem %s2228, %s2379
              $region57: #{tpu_custom_call.1} parent=51 // loop_footer
                %s2241 = sadd.s32 %s2239, 1
              $region58: #{tpu_custom_call.1} parent=51 // loop_footer_branch
                %2238 = sbr.rel target = $region54
              $region59: #{tpu_custom_call.1} parent=51 // loop_exit
                _
              %s2382 = sshrl.u32 %s2224, 6
              %s2383 = sand.u32 %s2224, 63
              %s2384 = smul.u32 %s2382, 64
              %s2385 = smul.u32 8, %s2384
              %s2386 = scalar_lea.vmem %s2217, %s2385 [#allocation2]
              %s2387 = smul.u32 8, %s2384
              %s2388 = scalar_lea.vmem %s2228, %s2387
              // While loop
              $region60: #{tpu_custom_call.1} parent=51 // loop_pre_header
                _
              $region61: #{tpu_custom_call.1} parent=51 // loop_header
                %s2390 = sphi 0, %s2392
                %p2391 = scmp.ge.s32.totalorder %s2390, %s2383
                %s2395 = sphi 0, %s2402
                %s2396 = sphi %s2386, %s2405
                %s2397 = sphi %s2388, %s2406
              $region62: #{tpu_custom_call.1} parent=51 // loop_header_branch
                %2394 = sbr.rel (%p2391) target = $region66
              $region63: #{tpu_custom_call.1} parent=51 // loop_body
                %v2398 = vld [vmem:[%s2396] sm:$0xff]
                %2399 = vst [vmem:[%s2397] sm:$0xff] %v2398
                %s2400 = sadd.s32 1, %s2395
                %p2401 = scmp.ge.s32.totalorder %s2400, %s2383
                %s2402 = scalar_select %p2401, 0, %s2400
                %s2403 = smul.u32 %s2402, 8
                %s2404 = smul.u32 %s2402, 8
                %s2405 = scalar_lea.vmem %s2386, %s2403 [#allocation2]
                %s2406 = scalar_lea.vmem %s2388, %s2404
              $region64: #{tpu_custom_call.1} parent=51 // loop_footer
                %s2392 = sadd.s32 %s2390, 1
              $region65: #{tpu_custom_call.1} parent=51 // loop_footer_branch
                %2389 = sbr.rel target = $region61
              $region66: #{tpu_custom_call.1} parent=51 // loop_exit
                _
            $region52: #{tpu_custom_call.1} parent=43 // pred_fallthru
              _
          $region44: #{tpu_custom_call.1} parent=39 // pred_fallthru
            _
          %2581 = vnop
        $region40: #{tpu_custom_call.1} parent=35 // pred_fallthru
          _
      $region36: #{tpu_custom_call.1} parent=5 // pred_fallthru
        _
      %p2582 = scmp.le.s32.totalorder 2, %s10
      // Predicated region
      $region89: #{tpu_custom_call.1} parent=5 // pred_check
        %p2583 = pneg %p2582
      $region90: #{tpu_custom_call.1} parent=5 // pred_check_branch
        %2585 = sbr.rel (%p2583) target = $region92
      $region91: #{tpu_custom_call.1} parent=5 // pred_region
        %s2586 = ssub.s32 %s10, 2
        // Predicated region
        $region93: #{tpu_custom_call.1} parent=91 // pred_check
          %p2587 = pneg %p133
        $region94: #{tpu_custom_call.1} parent=91 // pred_check_branch
          %2589 = sbr.rel (%p2587) target = $region96
        $region95: #{tpu_custom_call.1} parent=91 // pred_region
          %s2590 = sand.u32 %s118, 1
          %s2591 = sand.u32 %s118, 1
          %s2592 = smul.addr %s2591, 1024
          %s2593 = scalar_lea.vmem [#allocation2], %s2592
        $region96: #{tpu_custom_call.1} parent=91 // pred_fallthru
          _
      $region92: #{tpu_custom_call.1} parent=5 // pred_fallthru
        _
    $region6: #{tpu_custom_call.1} parent=1 // loop_footer
      %s14 = sadd.s32 1, %s10
    $region7: #{tpu_custom_call.1} parent=1 // loop_footer_branch
      %9 = sbr.rel target = $region3
    $region8: #{tpu_custom_call.1} parent=1 // loop_exit
      _

</llo_original>
